<compile_context>
chip_gen: v7x
topology: tpu7x:2x2x1
jax: 0.10.0
libtpu: 0.0.40
codegen_flags: <defaults>
</compile_context>

<pallas_src>
import functools

import jax
import jax.numpy as jnp
from jax.experimental import pallas as pl
from jax.experimental.pallas import tpu as pltpu


def _round_up(a, b):
    return (a + b - 1) // b * b


def _vmem_limit_bytes():
    """Per-generation scoped-VMEM request (leave headroom on 64 MiB v7x)."""
    try:
        kind = jax.devices()[0].device_kind.lower()
    except Exception:  # pragma: no cover
        kind = ""
    if "v2" in kind or "v3" in kind:
        return 12 * 1024 * 1024
    if "v5" in kind:
        return 64 * 1024 * 1024   # 128 MiB physical; scoped default is only 16 MiB
    if "v6" in kind:
        return 80 * 1024 * 1024   # 128 MiB physical
    return 48 * 1024 * 1024       # v7x: 64 MiB physical -> leave headroom


def _const_spec(block_shape, index_map):
    """BlockSpec for an operand whose block never changes across the grid.

    Single-buffer it (no point double-buffering a constant block); fall back
    to a plain spec if this JAX version has no pipeline_mode kwarg.
    """
    try:
        return pl.BlockSpec(block_shape, index_map, pipeline_mode=pl.Buffered(1))
    except Exception:  # pragma: no cover - older JAX without pipeline_mode
        return pl.BlockSpec(block_shape, index_map)


def _fused_matmul(x_ref, b_ref, Cin):
    """z[t, w*Cout+c] = sum_{i,v} x[i,t,v] * A[v,w] * W[c,i] for one block.

    x_ref: (Cin, bt, V) block of the native-layout input.
    b_ref: (Cin, V, VCoutP) fused conv+adjacency weight.
    Unrolled per-input-channel MXU matmuls, accumulated in f32 (no in-kernel
    relayout; MXU has ample slack in this HBM-bound regime).
    """
    acc = jnp.dot(x_ref[0], b_ref[0], preferred_element_type=jnp.float32)
    for i in range(1, Cin):
        acc = acc + jnp.dot(x_ref[i], b_ref[i],
                            preferred_element_type=jnp.float32)
    return acc


def _stats_kernel(x_ref, b_ref, bias_ref, stats_ref, *, Cin, T, bt):
    """Pass 1: per-(w,c) sum / sum-of-squares of z (z never written to HBM)."""
    t_blk = pl.program_id(1)

    @pl.when(t_blk == 0)
    def _():
        stats_ref[...] = jnp.zeros_like(stats_ref)

    z = _fused_matmul(x_ref, b_ref, Cin) + bias_ref[...]      # (bt, VCoutP) f32
    if T % bt:  # mask garbage rows of the partial tail time block
        rows = t_blk * bt + jax.lax.broadcasted_iota(jnp.int32, (bt, 1), 0)
        z = jnp.where(rows < T, z, 0.0)
    stats_ref[...] += jnp.concatenate(
        [jnp.sum(z, axis=0, keepdims=True),
         jnp.sum(z * z, axis=0, keepdims=True)], axis=0)


def _apply_kernel(x_ref, b_ref, shift_ref, o_ref, *, Cin):
    """Pass 2: recompute z with the BN affine folded in, ReLU, lane-dense store."""
    z = _fused_matmul(x_ref, b_ref, Cin) + shift_ref[...]
    o_ref[...] = jnp.maximum(z, 0.0).astype(o_ref.dtype)


def graph_conv_forward(x, conv_w, conv_b, A, gamma, beta, eps=1e-5,
                       bt=None, channels_last_out=False):
    """relu(batchnorm(einsum('nctv,vw->nctw', conv1x1(x), A))), training-mode BN.

    x:      (N, Cin, T, V) activations (float32 or bfloat16; bf16 halves the
            dominant HBM read, accumulation stays in f32).
    conv_w: (Cout, Cin, 1, 1); conv_b: (Cout,); A: (V, V) fixed adjacency.
    gamma/beta: (Cout,) BatchNorm2d affine parameters.
    Returns (N, Cout, T, V), or (N, T, V, Cout) if channels_last_out=True
    (skips the final layout copy for channels-last consumers).
    """
    N, Cin, T, V = x.shape
    Cout = conv_w.shape[0]
    VCout = V * Cout
    VCoutP = _round_up(VCout, 128)           # lane-dense (unmasked) stores
    f32 = jnp.float32
    compute_dtype = x.dtype if x.dtype == jnp.bfloat16 else f32
    vmem_limit = _vmem_limit_bytes()

    # ---- fused conv + adjacency weight (tiny, built once in XLA) ----------
    W2 = conv_w.reshape(Cout, Cin).astype(f32)
    A32 = A.astype(f32)
    Bf = jnp.einsum('vw,ci->ivwc', A32, W2).reshape(Cin, V, VCout)
    bias_row = (jnp.sum(A32, axis=0)[:, None]
                * conv_b.astype(f32)[None, :]).reshape(1, VCout)
    if VCoutP != VCout:                      # pad output lanes up to 128-multiple
        Bf = jnp.pad(Bf, ((0, 0), (0, 0), (0, VCoutP - VCout)))
        bias_row = jnp.pad(bias_row, ((0, 0), (0, VCoutP - VCout)))

    # ---- time tile: largest block fitting the per-generation VMEM budget --
    in_itemsize = jnp.dtype(compute_dtype).itemsize
    weight_bytes = Cin * V * VCoutP * in_itemsize
    per_row = Cin * V * in_itemsize + 2 * VCoutP * 4
    if bt is None:
        budget = max(vmem_limit - 2 * weight_bytes, 16 * per_row)
        cap = max(8, min(512, (budget // (2 * per_row)) // 8 * 8))
    else:
        cap = max(8, (bt // 8) * 8)
    bt = T if T <= cap else cap
    n_tb = pl.cdiv(T, bt)
    grid = (N, n_tb)

    x_spec = pl.BlockSpec((None, Cin, bt, V), lambda n, t: (n, 0, t, 0))
    b_spec = _const_spec((Cin, V, VCoutP), lambda n, t: (0, 0, 0))
    row_spec = _const_spec((1, VCoutP), lambda n, t: (0, 0))

    # ---- pass 1: batch statistics ------------------------------------------
    stats = pl.pallas_call(
        functools.partial(_stats_kernel, Cin=Cin, T=T, bt=bt),
        out_shape=jax.ShapeDtypeStruct((N, 2, VCoutP), f32),
        grid=grid,
        in_specs=[x_spec, b_spec, row_spec],
        out_specs=pl.BlockSpec((None, 2, VCoutP), lambda n, t: (n, 0, 0)),
        compiler_params=pltpu.CompilerParams(
            dimension_semantics=("parallel", "arbitrary"),
            vmem_limit_bytes=vmem_limit),
    )(x, Bf.astype(compute_dtype), bias_row)

    # ---- finalize training-mode BatchNorm stats (tiny, plain JAX) ----------
    stats = jnp.sum(stats, axis=0)[:, :VCout]                 # (2, V*Cout)
    stats_c = stats.reshape(2, V, Cout).sum(axis=1)           # (2, Cout)
    count = jnp.float32(N * T * V)
    mean = stats_c[0] / count
    var = jnp.maximum(stats_c[1] / count - mean * mean, 0.0)  # cancellation guard
    scale = gamma.astype(f32) / jnp.sqrt(var + eps)
    shift = beta.astype(f32) - mean * scale

    # Fold the BN affine into the fused weight / per-lane shift row.
    scale_vec = jnp.tile(scale, V)                            # index w*Cout + c
    shift_vec = jnp.tile(shift, V)
    if VCoutP != VCout:
        scale_vec = jnp.pad(scale_vec, (0, VCoutP - VCout))
        shift_vec = jnp.pad(shift_vec, (0, VCoutP - VCout))
    Bf_bn = (Bf * scale_vec[None, None, :]).astype(compute_dtype)
    shift_row = (bias_row[0] * scale_vec + shift_vec)[None, :]

    # ---- pass 2: BN-folded recompute + ReLU, lane-dense packed output ------
    y_packed = pl.pallas_call(
        functools.partial(_apply_kernel, Cin=Cin),
        out_shape=jax.ShapeDtypeStruct((N, T, VCoutP), x.dtype),
        grid=grid,
        in_specs=[x_spec, b_spec, row_spec],
        out_specs=pl.BlockSpec((None, bt, VCoutP), lambda n, t: (n, t, 0)),
        compiler_params=pltpu.CompilerParams(
            dimension_semantics=("parallel", "parallel"),
            vmem_limit_bytes=vmem_limit),
    )(x, Bf_bn, shift_row)

    out = y_packed[:, :, :VCout].reshape(N, T, V, Cout)       # (n, t, w, c)
    if channels_last_out:
        return out
    # Single fused slice+reshape+transpose copy under jit; prefer
    # channels_last_out=True when the consumer accepts (N, T, V, Cout).
    return jnp.transpose(out, (0, 3, 1, 2))                   # (N, Cout, T, V)


def graph_conv_reference(x, conv_w, conv_b, A, gamma, beta, eps=1e-5):
    """Pure-JAX reference matching the PyTorch module (training-mode BN)."""
    Cout = conv_w.shape[0]
    w2 = conv_w.reshape(Cout, -1)
    h = jnp.einsum('nctv,oc->notv', x, w2) + conv_b[None, :, None, None]
    z = jnp.einsum('nctv,vw->nctw', h, A)
    mean = jnp.mean(z, axis=(0, 2, 3), keepdims=True)
    var = jnp.var(z, axis=(0, 2, 3), keepdims=True)
    y = (z - mean) / jnp.sqrt(var + eps)
    y = y * gamma[None, :, None, None] + beta[None, :, None, None]
    return jnp.maximum(y, 0.0)


if __name__ == "__main__":
    graph_conv = jax.jit(graph_conv_forward,
                         static_argnames=("eps", "bt", "channels_last_out"))

    def check(out, ref, tag):
        assert out.shape == ref.shape, (tag, out.shape, ref.shape)
        err = float(jnp.max(jnp.abs(out - ref)))
        assert jnp.allclose(out, ref, atol=1e-4, rtol=1e-4), (tag, err)

    key = jax.random.PRNGKey(0)
    kx, kw, kb, ka, kx2, kx3, kw3, kb3, ka3 = jax.random.split(key, 9)

    # Module-consistent shapes: x is (N, Cin, T, V), adjacency A is (V, V).
    N, Cin, Cout, T, V = 2, 4, 8, 16, 16
    x = jax.random.normal(kx, (N, Cin, T, V), dtype=jnp.float32)
    conv_w = (jax.random.normal(kw, (Cout, Cin, 1, 1), dtype=jnp.float32)
              * (1.0 / jnp.sqrt(Cin)))
    conv_b = jax.random.normal(kb, (Cout,), dtype=jnp.float32) * 0.1
    A_raw = jax.random.uniform(ka, (V, V), dtype=jnp.float32)
    A = A_raw / jnp.sum(A_raw, axis=1, keepdims=True)
    gamma = jnp.ones((Cout,), dtype=jnp.float32)
    beta = jnp.zeros((Cout,), dtype=jnp.float32)

    ref = graph_conv_reference(x, conv_w, conv_b, A, gamma, beta)

    # 1) single time block per sample (bt = T), packed lane width V*Cout = 128.
    out = jax.block_until_ready(graph_conv(x, conv_w, conv_b, A, gamma, beta))
    check(out, ref, "base")

    # 2) multiple time blocks: exercises the stats accumulator (pl.when init).
    out_mb = jax.block_until_ready(
        graph_conv(x, conv_w, conv_b, A, gamma, beta, bt=8))
    check(out_mb, ref, "multi-block")

    # 3) channels-last output path (skips the final layout copy entirely).
    out_cl = jax.block_until_ready(
        graph_conv(x, conv_w, conv_b, A, gamma, beta, channels_last_out=True))
    check(out_cl, jnp.transpose(ref, (0, 2, 3, 1)), "channels-last")

    # 4) ragged T (block = full T dim, no padding anywhere).
    x2 = jax.random.normal(kx2, (3, Cin, 5, V), dtype=jnp.float32)
    ref2 = graph_conv_reference(x2, conv_w, conv_b, A, gamma, beta)
    out2 = jax.block_until_ready(graph_conv(x2, conv_w, conv_b, A, gamma, beta))
    check(out2, ref2, "ragged-T")

    # 5) V*Cout not a multiple of 128 (lane padding + slice-back) combined with
    #    a partial tail time block (in-kernel stats mask, masked boundary store).
    Cin3, Cout3, T3 = 3, 5, 12
    x3 = jax.random.normal(kx3, (N, Cin3, T3, V), dtype=jnp.float32)
    w3 = (jax.random.normal(kw3, (Cout3, Cin3, 1, 1), dtype=jnp.float32)
          * (1.0 / jnp.sqrt(Cin3)))
    b3 = jax.random.normal(kb3, (Cout3,), dtype=jnp.float32) * 0.1
    A3_raw = jax.random.uniform(ka3, (V, V), dtype=jnp.float32)
    A3 = A3_raw / jnp.sum(A3_raw, axis=1, keepdims=True)
    g3 = jnp.ones((Cout3,), dtype=jnp.float32) * 1.5
    be3 = jnp.ones((Cout3,), dtype=jnp.float32) * 0.25
    ref3 = graph_conv_reference(x3, w3, b3, A3, g3, be3)
    out3 = jax.block_until_ready(graph_conv(x3, w3, b3, A3, g3, be3, bt=8))
    check(out3, ref3, "padded-lanes+partial-block")

    print("KERNEL_OK")
</pallas_src>

<mosaic_0001>
module attributes {stable_mosaic.version = 11 : i64} {
  func.func @_stats_kernel(%arg0: i32, %arg1: i32, %arg2: memref<1x4x16x16xf32, #tpu.memory_space<vmem>>, %arg3: memref<4x16x128xf32, #tpu.memory_space<vmem>>, %arg4: memref<1x128xf32, #tpu.memory_space<vmem>>, %arg5: memref<1x2x128xf32, #tpu.memory_space<vmem>>) attributes {dimension_semantics = [#tpu.dimension_semantics<parallel>, #tpu.dimension_semantics<arbitrary>], iteration_bounds = array<i64: 2, 1>, scalar_prefetch = 0 : i64, scratch_operands = 0 : i64, tpu.core_type = #tpu.core_type<tc>, window_params = [{transform_indices = @transform_0, window_bounds = array<i64: 1, 4, 16, 16>}, {pipeline_mode = #tpu.pipeline_mode<synchronous>, transform_indices = @transform_1, window_bounds = array<i64: 4, 16, 128>}, {pipeline_mode = #tpu.pipeline_mode<synchronous>, transform_indices = @transform_2, window_bounds = array<i64: 1, 128>}, {transform_indices = @transform_3, window_bounds = array<i64: 1, 2, 128>}]} {
    %c0_i32 = arith.constant 0 : i32
    %0 = arith.cmpi eq, %arg1, %c0_i32 : i32
    %1 = arith.extui %0 : i1 to i32
    %c0_i32_0 = arith.constant 0 : i32
    %2 = arith.cmpi ne, %1, %c0_i32_0 : i32
    scf.if %2 {
      %cst_38 = arith.constant 0.000000e+00 : f32
      %41 = vector.broadcast %cst_38 : f32 to vector<2x128xf32>
      %c0_39 = arith.constant 0 : index
      %c0_40 = arith.constant 0 : index
      %c0_41 = arith.constant 0 : index
      %42 = vector.load %arg5[%c0_39, %c0_40, %c0_41] : memref<1x2x128xf32, #tpu.memory_space<vmem>>, vector<1x2x128xf32>
      %43 = vector.shape_cast %42 : vector<1x2x128xf32> to vector<2x128xf32>
      %44 = vector.shape_cast %41 : vector<2x128xf32> to vector<1x2x128xf32>
      tpu.vector_store %arg5[%c0_39, %c0_40, %c0_41], %44 {strides = array<i32>} : memref<1x2x128xf32, #tpu.memory_space<vmem>>, vector<1x2x128xf32>,
    } else {
    }
    %c0 = arith.constant 0 : index
    %c0_1 = arith.constant 0 : index
    %c0_2 = arith.constant 0 : index
    %c0_3 = arith.constant 0 : index
    %3 = vector.load %arg2[%c0, %c0_1, %c0_2, %c0_3] : memref<1x4x16x16xf32, #tpu.memory_space<vmem>>, vector<1x1x16x16xf32>
    %4 = vector.shape_cast %3 : vector<1x1x16x16xf32> to vector<16x16xf32>
    %c0_4 = arith.constant 0 : index
    %c0_5 = arith.constant 0 : index
    %c0_6 = arith.constant 0 : index
    %5 = vector.load %arg3[%c0_4, %c0_5, %c0_6] : memref<4x16x128xf32, #tpu.memory_space<vmem>>, vector<1x16x128xf32>
    %6 = vector.shape_cast %5 : vector<1x16x128xf32> to vector<16x128xf32>
    %cst = arith.constant dense<0.000000e+00> : vector<16x128xf32>
    %7 = tpu.matmul %4, %6, %cst {dimension_numbers = #tpu.dot_dimension_numbers<[1], [0], [0], [1], [0, 0, 1, 1], [], []>} : vector<16x16xf32>, vector<16x128xf32>, vector<16x128xf32> -> vector<16x128xf32>
    %c0_7 = arith.constant 0 : index
    %c1 = arith.constant 1 : index
    %c0_8 = arith.constant 0 : index
    %c0_9 = arith.constant 0 : index
    %8 = vector.load %arg2[%c0_7, %c1, %c0_8, %c0_9] : memref<1x4x16x16xf32, #tpu.memory_space<vmem>>, vector<1x1x16x16xf32>
    %9 = vector.shape_cast %8 : vector<1x1x16x16xf32> to vector<16x16xf32>
    %c1_10 = arith.constant 1 : index
    %c0_11 = arith.constant 0 : index
    %c0_12 = arith.constant 0 : index
    %10 = vector.load %arg3[%c1_10, %c0_11, %c0_12] : memref<4x16x128xf32, #tpu.memory_space<vmem>>, vector<1x16x128xf32>
    %11 = vector.shape_cast %10 : vector<1x16x128xf32> to vector<16x128xf32>
    %cst_13 = arith.constant dense<0.000000e+00> : vector<16x128xf32>
    %12 = tpu.matmul %9, %11, %cst_13 {dimension_numbers = #tpu.dot_dimension_numbers<[1], [0], [0], [1], [0, 0, 1, 1], [], []>} : vector<16x16xf32>, vector<16x128xf32>, vector<16x128xf32> -> vector<16x128xf32>
    %13 = arith.addf %7, %12 : vector<16x128xf32>
    %c0_14 = arith.constant 0 : index
    %c2 = arith.constant 2 : index
    %c0_15 = arith.constant 0 : index
    %c0_16 = arith.constant 0 : index
    %14 = vector.load %arg2[%c0_14, %c2, %c0_15, %c0_16] : memref<1x4x16x16xf32, #tpu.memory_space<vmem>>, vector<1x1x16x16xf32>
    %15 = vector.shape_cast %14 : vector<1x1x16x16xf32> to vector<16x16xf32>
    %c2_17 = arith.constant 2 : index
    %c0_18 = arith.constant 0 : index
    %c0_19 = arith.constant 0 : index
    %16 = vector.load %arg3[%c2_17, %c0_18, %c0_19] : memref<4x16x128xf32, #tpu.memory_space<vmem>>, vector<1x16x128xf32>
    %17 = vector.shape_cast %16 : vector<1x16x128xf32> to vector<16x128xf32>
    %cst_20 = arith.constant dense<0.000000e+00> : vector<16x128xf32>
    %18 = tpu.matmul %15, %17, %cst_20 {dimension_numbers = #tpu.dot_dimension_numbers<[1], [0], [0], [1], [0, 0, 1, 1], [], []>} : vector<16x16xf32>, vector<16x128xf32>, vector<16x128xf32> -> vector<16x128xf32>
    %19 = arith.addf %13, %18 : vector<16x128xf32>
    %c0_21 = arith.constant 0 : index
    %c3 = arith.constant 3 : index
    %c0_22 = arith.constant 0 : index
    %c0_23 = arith.constant 0 : index
    %20 = vector.load %arg2[%c0_21, %c3, %c0_22, %c0_23] : memref<1x4x16x16xf32, #tpu.memory_space<vmem>>, vector<1x1x16x16xf32>
    %21 = vector.shape_cast %20 : vector<1x1x16x16xf32> to vector<16x16xf32>
    %c3_24 = arith.constant 3 : index
    %c0_25 = arith.constant 0 : index
    %c0_26 = arith.constant 0 : index
    %22 = vector.load %arg3[%c3_24, %c0_25, %c0_26] : memref<4x16x128xf32, #tpu.memory_space<vmem>>, vector<1x16x128xf32>
    %23 = vector.shape_cast %22 : vector<1x16x128xf32> to vector<16x128xf32>
    %cst_27 = arith.constant dense<0.000000e+00> : vector<16x128xf32>
    %24 = tpu.matmul %21, %23, %cst_27 {dimension_numbers = #tpu.dot_dimension_numbers<[1], [0], [0], [1], [0, 0, 1, 1], [], []>} : vector<16x16xf32>, vector<16x128xf32>, vector<16x128xf32> -> vector<16x128xf32>
    %25 = arith.addf %19, %24 : vector<16x128xf32>
    %c0_28 = arith.constant 0 : index
    %c0_29 = arith.constant 0 : index
    %26 = vector.load %arg4[%c0_28, %c0_29] : memref<1x128xf32, #tpu.memory_space<vmem>>, vector<1x128xf32>
    %27 = vector.broadcast %26 : vector<1x128xf32> to vector<16x128xf32>
    %28 = arith.addf %25, %27 : vector<16x128xf32>
    %c0_30 = arith.constant 0 : index
    %c0_31 = arith.constant 0 : index
    %c0_32 = arith.constant 0 : index
    %29 = vector.load %arg5[%c0_30, %c0_31, %c0_32] : memref<1x2x128xf32, #tpu.memory_space<vmem>>, vector<1x2x128xf32>
    %30 = vector.shape_cast %29 : vector<1x2x128xf32> to vector<2x128xf32>
    %cst_33 = arith.constant dense<0.000000e+00> : vector<128xf32>
    %31 = vector.multi_reduction <add>, %28, %cst_33 [0] : vector<16x128xf32> to vector<128xf32>
    %32 = vector.shape_cast %31 : vector<128xf32> to vector<1x128xf32>
    %33 = arith.mulf %28, %28 : vector<16x128xf32>
    %cst_34 = arith.constant dense<0.000000e+00> : vector<128xf32>
    %34 = vector.multi_reduction <add>, %33, %cst_34 [0] : vector<16x128xf32> to vector<128xf32>
    %35 = vector.shape_cast %34 : vector<128xf32> to vector<1x128xf32>
    %36 = tpu.concatenate %32, %35 in 0 : vector<1x128xf32>, vector<1x128xf32> -> vector<2x128xf32>
    %37 = arith.addf %30, %36 : vector<2x128xf32>
    %c0_35 = arith.constant 0 : index
    %c0_36 = arith.constant 0 : index
    %c0_37 = arith.constant 0 : index
    %38 = vector.load %arg5[%c0_35, %c0_36, %c0_37] : memref<1x2x128xf32, #tpu.memory_space<vmem>>, vector<1x2x128xf32>
    %39 = vector.shape_cast %38 : vector<1x2x128xf32> to vector<2x128xf32>
    %40 = vector.shape_cast %37 : vector<2x128xf32> to vector<1x2x128xf32>
    tpu.vector_store %arg5[%c0_35, %c0_36, %c0_37], %40 {strides = array<i32>} : memref<1x2x128xf32, #tpu.memory_space<vmem>>, vector<1x2x128xf32>,
    return
  }
  func.func @transform_0(%arg0: i32, %arg1: i32) -> (i32, i32, i32, i32) {
    %c0_i32 = arith.constant 0 : i32
    %c0_i32_0 = arith.constant 0 : i32
    %c0_i32_1 = arith.constant 0 : i32
    return %arg0, %c0_i32, %arg1, %c0_i32_0 : i32, i32, i32, i32
  }
  func.func @transform_1(%arg0: i32, %arg1: i32) -> (i32, i32, i32) {
    %c0_i32 = arith.constant 0 : i32
    %c0_i32_0 = arith.constant 0 : i32
    %c0_i32_1 = arith.constant 0 : i32
    %c0_i32_2 = arith.constant 0 : i32
    return %c0_i32, %c0_i32_0, %c0_i32_1 : i32, i32, i32
  }
  func.func @transform_2(%arg0: i32, %arg1: i32) -> (i32, i32) {
    %c0_i32 = arith.constant 0 : i32
    %c0_i32_0 = arith.constant 0 : i32
    %c0_i32_1 = arith.constant 0 : i32
    return %c0_i32, %c0_i32_0 : i32, i32
  }
  func.func @transform_3(%arg0: i32, %arg1: i32) -> (i32, i32, i32) {
    %c0_i32 = arith.constant 0 : i32
    %c0_i32_0 = arith.constant 0 : i32
    %c0_i32_1 = arith.constant 0 : i32
    return %arg0, %c0_i32, %c0_i32_0 : i32, i32, i32
  }
}

module attributes {stable_mosaic.version = 11 : i64} {
  func.func @_apply_kernel(%arg0: i32, %arg1: i32, %arg2: memref<1x4x16x16xf32, #tpu.memory_space<vmem>>, %arg3: memref<4x16x128xf32, #tpu.memory_space<vmem>>, %arg4: memref<1x128xf32, #tpu.memory_space<vmem>>, %arg5: memref<1x16x128xf32, #tpu.memory_space<vmem>>) attributes {dimension_semantics = [#tpu.dimension_semantics<parallel>, #tpu.dimension_semantics<parallel>], iteration_bounds = array<i64: 2, 1>, scalar_prefetch = 0 : i64, scratch_operands = 0 : i64, tpu.core_type = #tpu.core_type<tc>, window_params = [{transform_indices = @transform_0, window_bounds = array<i64: 1, 4, 16, 16>}, {pipeline_mode = #tpu.pipeline_mode<synchronous>, transform_indices = @transform_1, window_bounds = array<i64: 4, 16, 128>}, {pipeline_mode = #tpu.pipeline_mode<synchronous>, transform_indices = @transform_2, window_bounds = array<i64: 1, 128>}, {transform_indices = @transform_3, window_bounds = array<i64: 1, 16, 128>}]} {
    %c0 = arith.constant 0 : index
    %c0_0 = arith.constant 0 : index
    %c0_1 = arith.constant 0 : index
    %c0_2 = arith.constant 0 : index
    %0 = vector.load %arg2[%c0, %c0_0, %c0_1, %c0_2] : memref<1x4x16x16xf32, #tpu.memory_space<vmem>>, vector<1x1x16x16xf32>
    %1 = vector.shape_cast %0 : vector<1x1x16x16xf32> to vector<16x16xf32>
    %c0_3 = arith.constant 0 : index
    %c0_4 = arith.constant 0 : index
    %c0_5 = arith.constant 0 : index
    %2 = vector.load %arg3[%c0_3, %c0_4, %c0_5] : memref<4x16x128xf32, #tpu.memory_space<vmem>>, vector<1x16x128xf32>
    %3 = vector.shape_cast %2 : vector<1x16x128xf32> to vector<16x128xf32>
    %cst = arith.constant dense<0.000000e+00> : vector<16x128xf32>
    %4 = tpu.matmul %1, %3, %cst {dimension_numbers = #tpu.dot_dimension_numbers<[1], [0], [0], [1], [0, 0, 1, 1], [], []>} : vector<16x16xf32>, vector<16x128xf32>, vector<16x128xf32> -> vector<16x128xf32>
    %c0_6 = arith.constant 0 : index
    %c1 = arith.constant 1 : index
    %c0_7 = arith.constant 0 : index
    %c0_8 = arith.constant 0 : index
    %5 = vector.load %arg2[%c0_6, %c1, %c0_7, %c0_8] : memref<1x4x16x16xf32, #tpu.memory_space<vmem>>, vector<1x1x16x16xf32>
    %6 = vector.shape_cast %5 : vector<1x1x16x16xf32> to vector<16x16xf32>
    %c1_9 = arith.constant 1 : index
    %c0_10 = arith.constant 0 : index
    %c0_11 = arith.constant 0 : index
    %7 = vector.load %arg3[%c1_9, %c0_10, %c0_11] : memref<4x16x128xf32, #tpu.memory_space<vmem>>, vector<1x16x128xf32>
    %8 = vector.shape_cast %7 : vector<1x16x128xf32> to vector<16x128xf32>
    %cst_12 = arith.constant dense<0.000000e+00> : vector<16x128xf32>
    %9 = tpu.matmul %6, %8, %cst_12 {dimension_numbers = #tpu.dot_dimension_numbers<[1], [0], [0], [1], [0, 0, 1, 1], [], []>} : vector<16x16xf32>, vector<16x128xf32>, vector<16x128xf32> -> vector<16x128xf32>
    %10 = arith.addf %4, %9 : vector<16x128xf32>
    %c0_13 = arith.constant 0 : index
    %c2 = arith.constant 2 : index
    %c0_14 = arith.constant 0 : index
    %c0_15 = arith.constant 0 : index
    %11 = vector.load %arg2[%c0_13, %c2, %c0_14, %c0_15] : memref<1x4x16x16xf32, #tpu.memory_space<vmem>>, vector<1x1x16x16xf32>
    %12 = vector.shape_cast %11 : vector<1x1x16x16xf32> to vector<16x16xf32>
    %c2_16 = arith.constant 2 : index
    %c0_17 = arith.constant 0 : index
    %c0_18 = arith.constant 0 : index
    %13 = vector.load %arg3[%c2_16, %c0_17, %c0_18] : memref<4x16x128xf32, #tpu.memory_space<vmem>>, vector<1x16x128xf32>
    %14 = vector.shape_cast %13 : vector<1x16x128xf32> to vector<16x128xf32>
    %cst_19 = arith.constant dense<0.000000e+00> : vector<16x128xf32>
    %15 = tpu.matmul %12, %14, %cst_19 {dimension_numbers = #tpu.dot_dimension_numbers<[1], [0], [0], [1], [0, 0, 1, 1], [], []>} : vector<16x16xf32>, vector<16x128xf32>, vector<16x128xf32> -> vector<16x128xf32>
    %16 = arith.addf %10, %15 : vector<16x128xf32>
    %c0_20 = arith.constant 0 : index
    %c3 = arith.constant 3 : index
    %c0_21 = arith.constant 0 : index
    %c0_22 = arith.constant 0 : index
    %17 = vector.load %arg2[%c0_20, %c3, %c0_21, %c0_22] : memref<1x4x16x16xf32, #tpu.memory_space<vmem>>, vector<1x1x16x16xf32>
    %18 = vector.shape_cast %17 : vector<1x1x16x16xf32> to vector<16x16xf32>
    %c3_23 = arith.constant 3 : index
    %c0_24 = arith.constant 0 : index
    %c0_25 = arith.constant 0 : index
    %19 = vector.load %arg3[%c3_23, %c0_24, %c0_25] : memref<4x16x128xf32, #tpu.memory_space<vmem>>, vector<1x16x128xf32>
    %20 = vector.shape_cast %19 : vector<1x16x128xf32> to vector<16x128xf32>
    %cst_26 = arith.constant dense<0.000000e+00> : vector<16x128xf32>
    %21 = tpu.matmul %18, %20, %cst_26 {dimension_numbers = #tpu.dot_dimension_numbers<[1], [0], [0], [1], [0, 0, 1, 1], [], []>} : vector<16x16xf32>, vector<16x128xf32>, vector<16x128xf32> -> vector<16x128xf32>
    %22 = arith.addf %16, %21 : vector<16x128xf32>
    %c0_27 = arith.constant 0 : index
    %c0_28 = arith.constant 0 : index
    %23 = vector.load %arg4[%c0_27, %c0_28] : memref<1x128xf32, #tpu.memory_space<vmem>>, vector<1x128xf32>
    %24 = vector.broadcast %23 : vector<1x128xf32> to vector<16x128xf32>
    %25 = arith.addf %22, %24 : vector<16x128xf32>
    %cst_29 = arith.constant 0.000000e+00 : f32
    %26 = vector.broadcast %cst_29 : f32 to vector<16x128xf32>
    %27 = arith.maximumf %25, %26 : vector<16x128xf32>
    %c0_30 = arith.constant 0 : index
    %c0_31 = arith.constant 0 : index
    %c0_32 = arith.constant 0 : index
    %28 = vector.load %arg5[%c0_30, %c0_31, %c0_32] : memref<1x16x128xf32, #tpu.memory_space<vmem>>, vector<1x16x128xf32>
    %29 = vector.shape_cast %28 : vector<1x16x128xf32> to vector<16x128xf32>
    %30 = vector.shape_cast %27 : vector<16x128xf32> to vector<1x16x128xf32>
    tpu.vector_store %arg5[%c0_30, %c0_31, %c0_32], %30 {strides = array<i32>} : memref<1x16x128xf32, #tpu.memory_space<vmem>>, vector<1x16x128xf32>,
    return
  }
  func.func @transform_0(%arg0: i32, %arg1: i32) -> (i32, i32, i32, i32) {
    %c0_i32 = arith.constant 0 : i32
    %c0_i32_0 = arith.constant 0 : i32
    %c0_i32_1 = arith.constant 0 : i32
    return %arg0, %c0_i32, %arg1, %c0_i32_0 : i32, i32, i32, i32
  }
  func.func @transform_1(%arg0: i32, %arg1: i32) -> (i32, i32, i32) {
    %c0_i32 = arith.constant 0 : i32
    %c0_i32_0 = arith.constant 0 : i32
    %c0_i32_1 = arith.constant 0 : i32
    %c0_i32_2 = arith.constant 0 : i32
    return %c0_i32, %c0_i32_0, %c0_i32_1 : i32, i32, i32
  }
  func.func @transform_2(%arg0: i32, %arg1: i32) -> (i32, i32) {
    %c0_i32 = arith.constant 0 : i32
    %c0_i32_0 = arith.constant 0 : i32
    %c0_i32_1 = arith.constant 0 : i32
    return %c0_i32, %c0_i32_0 : i32, i32
  }
  func.func @transform_3(%arg0: i32, %arg1: i32) -> (i32, i32, i32) {
    %c0_i32 = arith.constant 0 : i32
    %c0_i32_0 = arith.constant 0 : i32
    return %arg0, %arg1, %c0_i32 : i32, i32, i32
  }
}

</mosaic_0001>

<llo_original>
// kernel: tile.14
$region0: #{tile.14}
  #allocation0 [shape = 's32[1]{0}', space=sflag, size = 0x4, scoped, tag = 'scoped memory for tile.14']
  %s0 = inlined_call_operand.vmem [shape: f32[8], index: 0, kind: input, shape index: {}]
  %s1 = inlined_call_operand.vmem [shape: f32[16,8], index: 1, kind: output, shape index: {}]
  // Predicated region
  $region2: #{tile.14} parent=0 // pred_check
    _
  $region3: #{tile.14} parent=0 // pred_check_branch
    %3 = sbr.rel (0) target = $region5
  $region4: #{tile.14} parent=0 // pred_region
    _
  $region5: #{tile.14} parent=0 // pred_fallthru
    _
  %v4 = vld [vmem:[%s0] ss:$0 sm:$0xff]
  %5 = vst [vmem:[%s1] sm:$0xff] %v4
  %s6 = scalar_lea.vmem %s1, 8
  %7 = vst [vmem:[%s6] sm:$0xff] %v4

// kernel: mul.24
$region0: #{mul.24}
  %s0 = inlined_call_operand.vmem [shape: f32[16,8], index: 0, kind: input, shape index: {}]
  %s1 = inlined_call_operand.vmem [shape: f32[128], index: 1, kind: output, shape index: {}]
  $region1: #{mul.24} parent=0
    #allocation0 [shape = 'u8[4096]{0}', space=vmem, size = 0x1000, scoped, tag = 'scoped mem for output reshape']
    %v2 = vld [vmem:[%s0] sm:$0x1]
    %vm3 = vcmask 64512
    %4 = vst.msk [vmem:[#allocation0] sm:$0x1] %vm3, %v2
    %s5 = scalar_lea.vmem %s0, 15
    %v6 = vld [vmem:[%s5] sm:$0x1]
    %7 = vrot.lane.b32.xlu0 %v6, 120
    %v8 = vpop.permute.xlu0 %7
    %vm9 = vcmask 1048512
    %10 = vst.msk [vmem:[#allocation0] sm:$0x1] %vm9, %v8
    %s11 = scalar_lea.vmem %s0, 14
    %v12 = vld [vmem:[%s11] sm:$0x1]
    %13 = vrot.lane.b32.xlu0 %v12, 112
    %v14 = vpop.permute.xlu0 %13
    %vm15 = vcmask 982912
    %16 = vst.msk [vmem:[#allocation0] sm:$0x1] %vm15, %v14
    %s17 = scalar_lea.vmem %s0, 13
    %v18 = vld [vmem:[%s17] sm:$0x1]
    %19 = vrot.lane.b32.xlu0 %v18, 104
    %v20 = vpop.permute.xlu0 %19
    %vm21 = vcmask 917312
    %22 = vst.msk [vmem:[#allocation0] sm:$0x1] %vm21, %v20
    %s23 = scalar_lea.vmem %s0, 12
    %v24 = vld [vmem:[%s23] sm:$0x1]
    %25 = vrot.lane.b32.xlu0 %v24, 96
    %v26 = vpop.permute.xlu0 %25
    %vm27 = vcmask 851712
    %28 = vst.msk [vmem:[#allocation0] sm:$0x1] %vm27, %v26
    %s29 = scalar_lea.vmem %s0, 11
    %v30 = vld [vmem:[%s29] sm:$0x1]
    %31 = vrot.lane.b32.xlu0 %v30, 88
    %v32 = vpop.permute.xlu0 %31
    %vm33 = vcmask 786112
    %34 = vst.msk [vmem:[#allocation0] sm:$0x1] %vm33, %v32
    %s35 = scalar_lea.vmem %s0, 10
    %v36 = vld [vmem:[%s35] sm:$0x1]
    %37 = vrot.lane.b32.xlu0 %v36, 80
    %v38 = vpop.permute.xlu0 %37
    %vm39 = vcmask 720512
    %40 = vst.msk [vmem:[#allocation0] sm:$0x1] %vm39, %v38
    %s41 = scalar_lea.vmem %s0, 9
    %v42 = vld [vmem:[%s41] sm:$0x1]
    %43 = vrot.lane.b32.xlu0 %v42, 72
    %v44 = vpop.permute.xlu0 %43
    %vm45 = vcmask 654912
    %46 = vst.msk [vmem:[#allocation0] sm:$0x1] %vm45, %v44
    %s47 = scalar_lea.vmem %s0, 8
    %v48 = vld [vmem:[%s47] sm:$0x1]
    %49 = vrot.lane.b32.xlu0 %v48, 64
    %v50 = vpop.permute.xlu0 %49
    %vm51 = vcmask 589312
    %52 = vst.msk [vmem:[#allocation0] sm:$0x1] %vm51, %v50
    %s53 = scalar_lea.vmem %s0, 7
    %v54 = vld [vmem:[%s53] sm:$0x1]
    %55 = vrot.lane.b32.xlu0 %v54, 56
    %v56 = vpop.permute.xlu0 %55
    %vm57 = vcmask 523712
    %58 = vst.msk [vmem:[#allocation0] sm:$0x1] %vm57, %v56
    %s59 = scalar_lea.vmem %s0, 6
    %v60 = vld [vmem:[%s59] sm:$0x1]
    %61 = vrot.lane.b32.xlu0 %v60, 48
    %v62 = vpop.permute.xlu0 %61
    %vm63 = vcmask 458112
    %64 = vst.msk [vmem:[#allocation0] sm:$0x1] %vm63, %v62
    %s65 = scalar_lea.vmem %s0, 5
    %v66 = vld [vmem:[%s65] sm:$0x1]
    %67 = vrot.lane.b32.xlu0 %v66, 40
    %v68 = vpop.permute.xlu0 %67
    %vm69 = vcmask 392512
    %70 = vst.msk [vmem:[#allocation0] sm:$0x1] %vm69, %v68
    %s71 = scalar_lea.vmem %s0, 4
    %v72 = vld [vmem:[%s71] sm:$0x1]
    %73 = vrot.lane.b32.xlu0 %v72, 32
    %v74 = vpop.permute.xlu0 %73
    %vm75 = vcmask 326912
    %76 = vst.msk [vmem:[#allocation0] sm:$0x1] %vm75, %v74
    %s77 = scalar_lea.vmem %s0, 3
    %v78 = vld [vmem:[%s77] sm:$0x1]
    %79 = vrot.lane.b32.xlu0 %v78, 24
    %v80 = vpop.permute.xlu0 %79
    %vm81 = vcmask 261312
    %82 = vst.msk [vmem:[#allocation0] sm:$0x1] %vm81, %v80
    %s83 = scalar_lea.vmem %s0, 2
    %v84 = vld [vmem:[%s83] sm:$0x1]
    %85 = vrot.lane.b32.xlu0 %v84, 16
    %v86 = vpop.permute.xlu0 %85
    %vm87 = vcmask 195712
    %88 = vst.msk [vmem:[#allocation0] sm:$0x1] %vm87, %v86
    %s89 = scalar_lea.vmem %s0, 1
    %v90 = vld [vmem:[%s89] sm:$0x1]
    %91 = vrot.lane.b32.xlu0 %v90, 8
    %v92 = vpop.permute.xlu0 %91
    %vm93 = vcmask 130112
    %94 = vst.msk [vmem:[#allocation0] sm:$0x1] %vm93, %v92
    %s96 = sshllo.u32 0, 1
    %v98 = vld [vmem:[#allocation0] sm:%s96]
    %s99 = sshllo.u32 0, 1
    %100 = vst [vmem:[%s1] sm:%s99] %v98

// kernel: graph_conv_forward.2
$region0: #{graph_conv_forward.2}
  #allocation0 [shape = 'u32[]', space=smem, size = 0x4, offset = 0x4, fixed_abs, tag = 'smem constant byte address 0x4 - core index']
  #allocation1 [shape = 'u32[144,128]{1,0:T(1,128)}', space=vmem, size = 0x12000, scoped, tag = 'internal scratch']
  %s0 = inlined_call_operand.vmem [shape: f32[2,4,16,16], index: 0, kind: input, shape index: {}]
  %s1 = inlined_call_operand.vmem [shape: f32[4,16,128], index: 1, kind: input, shape index: {}]
  %s2 = inlined_call_operand.vmem [shape: f32[1,128], index: 2, kind: input, shape index: {}]
  %s3 = inlined_call_operand.vmem [shape: f32[2,2,128], index: 3, kind: output, shape index: {}]
  %s4 = sld [smem:[#allocation0]]
  $region49: #{graph_conv_forward.2} parent=0
    _
  %s6 = ssub.s32 1, %s4
  %s7 = scalar_select 0, %s6, %s4
  loop: start=0, step=1, limit=4
  $region2: #{graph_conv_forward.2} parent=0 // loop_pre_header
    _
  $region3: #{graph_conv_forward.2} parent=0 // loop_header
    %s9 = sphi 0, %s13
    %p10 = scmp.ge.s32.totalorder %s9, 4
    %s16 = sphi 0, %s28
    %s17 = sphi 0, %s24
    %s18 = sphi 0, %s16
    %s19 = sphi 0, %s17
    %s20 = sphi 0, %s18
    %s21 = sphi 0, %s19
    %s33 = sphi 0, %s35
    %s36 = sphi 0, %s33
    %s37 = sphi 0, %s36
    %s53 = sphi 0, %s37
    %s57 = sphi 0, %s57
    %s59 = sphi 0, %s57
    %s60 = sphi 0, %s59
    %s74 = sphi 0, %s60
    %s78 = sphi 0, %s78
    %s80 = sphi 0, %s78
    %s81 = sphi 0, %s80
    %s95 = sphi 0, %s81
    %s101 = sphi 0, %s103
    %s104 = sphi 0, %s101
    %s105 = sphi 0, %s104
    %s121 = sphi 0, %s105
  $region4: #{graph_conv_forward.2} parent=0 // loop_header_branch
    %12 = sbr.rel (%p10) target = $region8
  $region5: #{graph_conv_forward.2} parent=0 // loop_body
    %s14 = ssub.s32 %s9, 1
    %s15 = ssub.s32 %s9, 2
    %s22 = sadd.s32 1, %s17
    %p23 = scmp.ge.s32.totalorder %s22, 1
    %s24 = scalar_select %p23, 0, %s22
    %s25 = sadd.s32 1, %s16
    %s26 = scalar_select %p23, %s25, %s16
    %p27 = scmp.ge.s32.totalorder %s26, 2
    %s28 = scalar_select %p27, 0, %s26
    %s29 = ssub.s32 %s16, %s28
    %s30 = ssub.s32 %s17, %s24
    %s31 = sor.u32 %s29, %s30
    %p32 = scmp.eq.s32.totalorder %s31, 0
    %s34 = sadd.s32 %s33, 1
    %s35 = scalar_select %p32, %s33, %s34
    %p38 = pneg %p32
    %p39 = scmp.eq.s32.totalorder %s9, 1
    %p40 = por %p38, %p39
    %p41 = scmp.ne.s32.totalorder %s33, %s36
    %p42 = scmp.eq.s32.totalorder %s9, 0
    %p43 = por %p41, %p42
    %p44 = scmp.ne.s32.totalorder %s33, %s36
    %p45 = scmp.eq.s32.totalorder %s14, 1
    %p46 = por %p44, %p45
    %p47 = scmp.ne.s32.totalorder %s36, %s37
    %p48 = scmp.eq.s32.totalorder %s14, 0
    %p49 = por %p47, %p48
    %p50 = scmp.ne.s32.totalorder %s36, %s37
    %p51 = scmp.eq.s32.totalorder %s15, 1
    %p52 = por %p50, %p51
    %p54 = scmp.ne.s32.totalorder %s37, %s53
    %p55 = scmp.eq.s32.totalorder %s15, 0
    %p56 = por %p54, %p55
    %s58 = sadd.s32 %s57, 1
    %p61 = scmp.eq.s32.totalorder %s9, 1
    %p62 = scmp.ne.s32.totalorder %s57, %s59
    %p63 = scmp.eq.s32.totalorder %s9, 0
    %p64 = por %p62, %p63
    %p65 = scmp.ne.s32.totalorder %s57, %s59
    %p66 = scmp.eq.s32.totalorder %s14, 1
    %p67 = por %p65, %p66
    %p68 = scmp.ne.s32.totalorder %s59, %s60
    %p69 = scmp.eq.s32.totalorder %s14, 0
    %p70 = por %p68, %p69
    %p71 = scmp.ne.s32.totalorder %s59, %s60
    %p72 = scmp.eq.s32.totalorder %s15, 1
    %p73 = por %p71, %p72
    %p75 = scmp.ne.s32.totalorder %s60, %s74
    %p76 = scmp.eq.s32.totalorder %s15, 0
    %p77 = por %p75, %p76
    %s79 = sadd.s32 %s78, 1
    %p82 = scmp.eq.s32.totalorder %s9, 1
    %p83 = scmp.ne.s32.totalorder %s78, %s80
    %p84 = scmp.eq.s32.totalorder %s9, 0
    %p85 = por %p83, %p84
    %p86 = scmp.ne.s32.totalorder %s78, %s80
    %p87 = scmp.eq.s32.totalorder %s14, 1
    %p88 = por %p86, %p87
    %p89 = scmp.ne.s32.totalorder %s80, %s81
    %p90 = scmp.eq.s32.totalorder %s14, 0
    %p91 = por %p89, %p90
    %p92 = scmp.ne.s32.totalorder %s80, %s81
    %p93 = scmp.eq.s32.totalorder %s15, 1
    %p94 = por %p92, %p93
    %p96 = scmp.ne.s32.totalorder %s81, %s95
    %p97 = scmp.eq.s32.totalorder %s15, 0
    %p98 = por %p96, %p97
    %s99 = ssub.s32 %s16, %s28
    %p100 = scmp.eq.s32.totalorder %s99, 0
    %s102 = sadd.s32 %s101, 1
    %s103 = scalar_select %p100, %s101, %s102
    %p106 = pneg %p100
    %p107 = scmp.eq.s32.totalorder %s9, 1
    %p108 = por %p106, %p107
    %p109 = scmp.ne.s32.totalorder %s101, %s104
    %p110 = scmp.eq.s32.totalorder %s9, 0
    %p111 = por %p109, %p110
    %p112 = scmp.ne.s32.totalorder %s101, %s104
    %p113 = scmp.eq.s32.totalorder %s14, 1
    %p114 = por %p112, %p113
    %p115 = scmp.ne.s32.totalorder %s104, %s105
    %p116 = scmp.eq.s32.totalorder %s14, 0
    %p117 = por %p115, %p116
    %p118 = scmp.ne.s32.totalorder %s104, %s105
    %p119 = scmp.eq.s32.totalorder %s15, 1
    %p120 = por %p118, %p119
    %p122 = scmp.ne.s32.totalorder %s105, %s121
    %p123 = scmp.eq.s32.totalorder %s15, 0
    %p124 = por %p122, %p123
    %p125 = scmp.le.s32.totalorder 1, %s9
    %p126 = scmp.lt.s32.totalorder %s9, 3
    %p127 = pnand %p125, %p126
    %p128 = pneg %p127
    // Predicated region
    $region9: #{graph_conv_forward.2} parent=5 // pred_check
      _
    $region10: #{graph_conv_forward.2} parent=5 // pred_check_branch
      %130 = sbr.rel (%p127) target = $region12
    $region11: #{graph_conv_forward.2} parent=5 // pred_region
      %s131 = ssub.s32 %s9, 1
      // Predicated region
      $region13: #{graph_conv_forward.2} parent=11 // pred_check
        %p132 = pneg %p70
      $region14: #{graph_conv_forward.2} parent=11 // pred_check_branch
        %134 = sbr.rel (%p132) target = $region16
      $region15: #{graph_conv_forward.2} parent=11 // pred_region
        _
      $region16: #{graph_conv_forward.2} parent=11 // pred_fallthru
        _
      // Predicated region
      $region17: #{graph_conv_forward.2} parent=11 // pred_check
        %p135 = pneg %p91
      $region18: #{graph_conv_forward.2} parent=11 // pred_check_branch
        %137 = sbr.rel (%p135) target = $region20
      $region19: #{graph_conv_forward.2} parent=11 // pred_region
        _
      $region20: #{graph_conv_forward.2} parent=11 // pred_fallthru
        _
    $region12: #{graph_conv_forward.2} parent=5 // pred_fallthru
      _
    %p138 = scmp.lt.s32.totalorder %s9, 2
    // Predicated region
    $region21: #{graph_conv_forward.2} parent=5 // pred_check
      %p139 = pneg %p138
    $region22: #{graph_conv_forward.2} parent=5 // pred_check_branch
      %141 = sbr.rel (%p139) target = $region24
    $region23: #{graph_conv_forward.2} parent=5 // pred_region
      // Predicated region
      $region25: #{graph_conv_forward.2} parent=23 // pred_check
        %p142 = pneg %p43
      $region26: #{graph_conv_forward.2} parent=23 // pred_check_branch
        %144 = sbr.rel (%p142) target = $region28
      $region27: #{graph_conv_forward.2} parent=23 // pred_region
        %s145 = smul.u32 2, %s17
        %p146 = scmp.lt.s32.totalorder %s16, 1
        %s147 = scalar_select %p146, %s16, 1
        %p148 = scmp.lt.s32.totalorder %s145, 1
        %s149 = scalar_select %p148, %s145, 1
        %s150 = smul.addr %s147, 8
        %s151 = sadd.s32 %s149, %s150
        %s152 = smul.addr %s151, 8
        %s153 = scalar_lea.vmem %s0, %s152
        %s154 = smul.u32 2, %s17
      $region28: #{graph_conv_forward.2} parent=23 // pred_fallthru
        _
    $region24: #{graph_conv_forward.2} parent=5 // pred_fallthru
      _
    %p155 = scmp.le.s32.totalorder 1, %s9
    %p156 = scmp.lt.s32.totalorder %s9, 3
    %p157 = pnand %p155, %p156
    %p158 = pneg %p157
    // Predicated region
    $region29: #{graph_conv_forward.2} parent=5 // pred_check
      _
    $region30: #{graph_conv_forward.2} parent=5 // pred_check_branch
      %160 = sbr.rel (%p157) target = $region32
    $region31: #{graph_conv_forward.2} parent=5 // pred_region
      %s161 = ssub.s32 %s9, 1
      %s162 = smul.u32 2, %s19
      %p163 = scmp.lt.s32.totalorder %s18, 1
      %s164 = scalar_select %p163, %s18, 1
      %p165 = scmp.lt.s32.totalorder %s162, 1
      %s166 = scalar_select %p165, %s162, 1
      %s167 = smul.addr %s164, 8
      %s168 = sadd.s32 %s166, %s167
      %s169 = smul.addr %s168, 8
      %s170 = scalar_lea.vmem %s0, %s169
      %p171 = pneg %p49
      %p172 = pneg %p46
      %p173 = pneg %p70
      %p174 = pneg %p67
      %p175 = pneg %p91
      %p176 = pneg %p88
      %p177 = pneg %p117
      %p178 = pneg %p114
      %p179 = scmp.lt.s32.totalorder %s18, 1
      %s180 = scalar_select %p179, %s18, 1
      %s181 = smul.addr %s180, 2
      %s182 = scalar_lea.vmem %s3, %s181
      %s183 = smul.u32 2, %s19
      %p184 = scmp.lt.s32.totalorder %s18, 1
      %s185 = scalar_select %p184, %s18, 1
      %p186 = scmp.lt.s32.totalorder %s183, 1
      %s187 = scalar_select %p186, %s183, 1
      %s188 = smul.addr %s185, 8
      %s189 = sadd.s32 %s187, %s188
      %s190 = smul.addr %s189, 8
      %s191 = scalar_lea.vmem %s0, %s190
      %s192 = smul.u32 2, %s19
      %p193 = scmp.lt.s32.totalorder %s18, 1
      %s194 = scalar_select %p193, %s18, 1
      %s195 = smul.addr %s194, 2
      %s196 = scalar_lea.vmem %s3, %s195
      %p197 = scmp.eq.s32.totalorder %s19, 0
      // Predicated region
      $region33: #{graph_conv_forward.2} parent=31 // pred_check
        %p198 = pneg %p197
      $region34: #{graph_conv_forward.2} parent=31 // pred_check_branch
        %200 = sbr.rel (%p198) target = $region36
      $region35: #{graph_conv_forward.2} parent=31 // pred_region
        %201 = vst [vmem:[%s196] sm:$0x3] 0.0
      $region36: #{graph_conv_forward.2} parent=31 // pred_fallthru
        _
      %v202 = vld [vmem:[%s191] sm:$0xff]
      %v203 = vld [vmem:[%s191 + $0x8] sm:$0xff]
      %v204 = vld [vmem:[%s1] sm:$0xff]
      %v205 = vld [vmem:[%s1 + $0x8] sm:$0xff]
      %s206 = scalar_lea.vmem %s191, 16
      %v207 = vld [vmem:[%s206] sm:$0xff]
      %v208 = vld [vmem:[%s206 + $0x8] sm:$0xff]
      %s209 = scalar_lea.vmem %s1, 16
      %v210 = vld [vmem:[%s209] sm:$0xff]
      %v211 = vld [vmem:[%s209 + $0x8] sm:$0xff]
      %vm212 = vcmask 130048
      %v214 = vsel %vm212, %v207, 0
      %v217 = vsel %vm212, %v208, 0
      %219 = vmatprep.subr.mxu0 0.0
      %220 = vmatpush1.msra.mxu0 %v210
      %221 = vmatprep.subr.mxu0 0.0
      %222 = vmatpush1.msra.mxu0 %v211
      %223 = vmatprep.subr.mxu0 0.0
      %224 = vmatpush1.msra.mxu0 0.0
      %225 = vmatprep.subr.mxu0 0.0
      %226 = vmatpush1.msra.mxu0 0.0
      %227 = vmatprep.subr.mxu0 0.0
      %228 = vmatpush1.msra.mxu0 0.0
      %229 = vmatprep.subr.mxu0 0.0
      %230 = vmatpush1.msra.mxu0 0.0
      %231 = vmatprep.subr.mxu0 0.0
      %232 = vmatpush1.msra.mxu0 0.0
      %233 = vmatprep.subr.mxu0 0.0
      %234 = vmatpush1.msra.mxu0 0.0
      %235 = vmatprep.subr.mxu0 0.0
      %236 = vmatpush1.msra.mxu0 0.0
      %237 = vmatprep.subr.mxu0 0.0
      %238 = vmatpush1.msra.mxu0 0.0
      %239 = vmatprep.subr.mxu0 0.0
      %240 = vmatpush1.msra.mxu0 0.0
      %241 = vmatprep.subr.mxu0 0.0
      %242 = vmatpush1.msra.mxu0 0.0
      %243 = vmatprep.subr.mxu0 0.0
      %244 = vmatpush1.msra.mxu0 0.0
      %245 = vmatprep.subr.mxu0 0.0
      %246 = vmatpush1.msra.mxu0 0.0
      %247 = vmatprep.subr.mxu0 0.0
      %248 = vmatpush1.msra.mxu0 0.0
      %249 = vmatprep.subr.mxu0 0.0
      %250 = vmatpush1.msra.mxu0 0.0
      %251 = vmatprep.subr.mxu0 0.0
      %252 = vmatpush1.msra.mxu0 0.0
      %253 = vmatprep.subr.mxu0 0.0
      %254 = vmatpush1.msra.mxu0 0.0
      %255 = vmatprep.subr.mxu0 0.0
      %256 = vmatpush1.msra.mxu0 0.0
      %257 = vmatprep.subr.mxu0 0.0
      %258 = vmatpush1.msra.mxu0 0.0
      %259 = vmatprep.subr.mxu0 0.0
      %260 = vmatpush1.msra.mxu0 0.0
      %261 = vmatprep.subr.mxu0 0.0
      %262 = vmatpush1.msra.mxu0 0.0
      %263 = vmatprep.subr.mxu0 0.0
      %264 = vmatpush1.msra.mxu0 0.0
      %265 = vmatprep.subr.mxu0 0.0
      %266 = vmatpush1.msra.mxu0 0.0
      %267 = vmatprep.subr.mxu0 0.0
      %268 = vmatpush1.msra.mxu0 0.0
      %269 = vmatprep.subr.mxu0 0.0
      %270 = vmatpush1.msra.mxu0 0.0
      %271 = vmatprep.subr.mxu0 0.0
      %272 = vmatpush1.msra.mxu0 0.0
      %273 = vmatprep.subr.mxu0 0.0
      %274 = vmatpush1.msra.mxu0 0.0
      %275 = vmatprep.subr.mxu0 0.0
      %276 = vmatpush1.msra.mxu0 0.0
      %277 = vmatprep.subr.mxu0 0.0
      %278 = vmatpush1.msra.mxu0 0.0
      %279 = vmatprep.subr.mxu0 0.0
      %280 = vmatpush1.msra.mxu0 0.0
      %281 = vmatprep.subr.mxu0 0.0
      %282 = vmatpush1.msra.mxu0 0.0
      %283 = vmatprep.mubr.f32.mxu0 0.0
      %284 = vmatmul.mubr.f32.gmra.mrb[0].mxu0 %v214
      %v285 = vpop.f32.mrb[0].mxu0
      %v286 = vadd.f32 0.0, %v285
      %v287 = vpop.f32.mrb[0].mxu0
      %288 = vmatprep.mubr.f32.mxu0 0.0
      %289 = vmatmul.mubr.f32.gmra.mrb[0].mxu0 %v217
      %v290 = vpop.f32.mrb[0].mxu0
      %v291 = vadd.f32 0.0, %v290
      %v292 = vpop.f32.mrb[0].mxu0
      %293 = vdwg.mxu0
      %v295 = vsel %vm212, %v202, 0
      %v298 = vsel %vm212, %v203, 0
      %300 = vmatprep.subr.mxu0 0.0
      %301 = vmatpush1.msra.mxu0 %v204
      %302 = vmatprep.subr.mxu0 0.0
      %303 = vmatpush1.msra.mxu0 %v205
      %304 = vmatprep.subr.mxu0 0.0
      %305 = vmatpush1.msra.mxu0 0.0
      %306 = vmatprep.subr.mxu0 0.0
      %307 = vmatpush1.msra.mxu0 0.0
      %308 = vmatprep.subr.mxu0 0.0
      %309 = vmatpush1.msra.mxu0 0.0
      %310 = vmatprep.subr.mxu0 0.0
      %311 = vmatpush1.msra.mxu0 0.0
      %312 = vmatprep.subr.mxu0 0.0
      %313 = vmatpush1.msra.mxu0 0.0
      %314 = vmatprep.subr.mxu0 0.0
      %315 = vmatpush1.msra.mxu0 0.0
      %316 = vmatprep.subr.mxu0 0.0
      %317 = vmatpush1.msra.mxu0 0.0
      %318 = vmatprep.subr.mxu0 0.0
      %319 = vmatpush1.msra.mxu0 0.0
      %320 = vmatprep.subr.mxu0 0.0
      %321 = vmatpush1.msra.mxu0 0.0
      %322 = vmatprep.subr.mxu0 0.0
      %323 = vmatpush1.msra.mxu0 0.0
      %324 = vmatprep.subr.mxu0 0.0
      %325 = vmatpush1.msra.mxu0 0.0
      %326 = vmatprep.subr.mxu0 0.0
      %327 = vmatpush1.msra.mxu0 0.0
      %328 = vmatprep.subr.mxu0 0.0
      %329 = vmatpush1.msra.mxu0 0.0
      %330 = vmatprep.subr.mxu0 0.0
      %331 = vmatpush1.msra.mxu0 0.0
      %332 = vmatprep.subr.mxu0 0.0
      %333 = vmatpush1.msra.mxu0 0.0
      %334 = vmatprep.subr.mxu0 0.0
      %335 = vmatpush1.msra.mxu0 0.0
      %336 = vmatprep.subr.mxu0 0.0
      %337 = vmatpush1.msra.mxu0 0.0
      %338 = vmatprep.subr.mxu0 0.0
      %339 = vmatpush1.msra.mxu0 0.0
      %340 = vmatprep.subr.mxu0 0.0
      %341 = vmatpush1.msra.mxu0 0.0
      %342 = vmatprep.subr.mxu0 0.0
      %343 = vmatpush1.msra.mxu0 0.0
      %344 = vmatprep.subr.mxu0 0.0
      %345 = vmatpush1.msra.mxu0 0.0
      %346 = vmatprep.subr.mxu0 0.0
      %347 = vmatpush1.msra.mxu0 0.0
      %348 = vmatprep.subr.mxu0 0.0
      %349 = vmatpush1.msra.mxu0 0.0
      %350 = vmatprep.subr.mxu0 0.0
      %351 = vmatpush1.msra.mxu0 0.0
      %352 = vmatprep.subr.mxu0 0.0
      %353 = vmatpush1.msra.mxu0 0.0
      %354 = vmatprep.subr.mxu0 0.0
      %355 = vmatpush1.msra.mxu0 0.0
      %356 = vmatprep.subr.mxu0 0.0
      %357 = vmatpush1.msra.mxu0 0.0
      %358 = vmatprep.subr.mxu0 0.0
      %359 = vmatpush1.msra.mxu0 0.0
      %360 = vmatprep.subr.mxu0 0.0
      %361 = vmatpush1.msra.mxu0 0.0
      %362 = vmatprep.subr.mxu0 0.0
      %363 = vmatpush1.msra.mxu0 0.0
      %364 = vmatprep.mubr.f32.mxu0 0.0
      %365 = vmatmul.mubr.f32.gmra.mrb[0].mxu0 %v295
      %v366 = vpop.f32.mrb[0].mxu0
      %v367 = vadd.f32 %v286, %v366
      %v368 = vpop.f32.mrb[0].mxu0
      %369 = vmatprep.mubr.f32.mxu0 0.0
      %370 = vmatmul.mubr.f32.gmra.mrb[0].mxu0 %v298
      %v371 = vpop.f32.mrb[0].mxu0
      %v372 = vadd.f32 %v291, %v371
      %v373 = vpop.f32.mrb[0].mxu0
      %374 = vdwg.mxu0
      %s375 = scalar_lea.vmem %s191, 32
      %v376 = vld [vmem:[%s375] sm:$0xff]
      %v377 = vld [vmem:[%s375 + $0x8] sm:$0xff]
      %s378 = scalar_lea.vmem %s1, 32
      %v379 = vld [vmem:[%s378] sm:$0xff]
      %v380 = vld [vmem:[%s378 + $0x8] sm:$0xff]
      %v382 = vsel %vm212, %v376, 0
      %v385 = vsel %vm212, %v377, 0
      %387 = vmatprep.subr.mxu0 0.0
      %388 = vmatpush1.msra.mxu0 %v379
      %389 = vmatprep.subr.mxu0 0.0
      %390 = vmatpush1.msra.mxu0 %v380
      %391 = vmatprep.subr.mxu0 0.0
      %392 = vmatpush1.msra.mxu0 0.0
      %393 = vmatprep.subr.mxu0 0.0
      %394 = vmatpush1.msra.mxu0 0.0
      %395 = vmatprep.subr.mxu0 0.0
      %396 = vmatpush1.msra.mxu0 0.0
      %397 = vmatprep.subr.mxu0 0.0
      %398 = vmatpush1.msra.mxu0 0.0
      %399 = vmatprep.subr.mxu0 0.0
      %400 = vmatpush1.msra.mxu0 0.0
      %401 = vmatprep.subr.mxu0 0.0
      %402 = vmatpush1.msra.mxu0 0.0
      %403 = vmatprep.subr.mxu0 0.0
      %404 = vmatpush1.msra.mxu0 0.0
      %405 = vmatprep.subr.mxu0 0.0
      %406 = vmatpush1.msra.mxu0 0.0
      %407 = vmatprep.subr.mxu0 0.0
      %408 = vmatpush1.msra.mxu0 0.0
      %409 = vmatprep.subr.mxu0 0.0
      %410 = vmatpush1.msra.mxu0 0.0
      %411 = vmatprep.subr.mxu0 0.0
      %412 = vmatpush1.msra.mxu0 0.0
      %413 = vmatprep.subr.mxu0 0.0
      %414 = vmatpush1.msra.mxu0 0.0
      %415 = vmatprep.subr.mxu0 0.0
      %416 = vmatpush1.msra.mxu0 0.0
      %417 = vmatprep.subr.mxu0 0.0
      %418 = vmatpush1.msra.mxu0 0.0
      %419 = vmatprep.subr.mxu0 0.0
      %420 = vmatpush1.msra.mxu0 0.0
      %421 = vmatprep.subr.mxu0 0.0
      %422 = vmatpush1.msra.mxu0 0.0
      %423 = vmatprep.subr.mxu0 0.0
      %424 = vmatpush1.msra.mxu0 0.0
      %425 = vmatprep.subr.mxu0 0.0
      %426 = vmatpush1.msra.mxu0 0.0
      %427 = vmatprep.subr.mxu0 0.0
      %428 = vmatpush1.msra.mxu0 0.0
      %429 = vmatprep.subr.mxu0 0.0
      %430 = vmatpush1.msra.mxu0 0.0
      %431 = vmatprep.subr.mxu0 0.0
      %432 = vmatpush1.msra.mxu0 0.0
      %433 = vmatprep.subr.mxu0 0.0
      %434 = vmatpush1.msra.mxu0 0.0
      %435 = vmatprep.subr.mxu0 0.0
      %436 = vmatpush1.msra.mxu0 0.0
      %437 = vmatprep.subr.mxu0 0.0
      %438 = vmatpush1.msra.mxu0 0.0
      %439 = vmatprep.subr.mxu0 0.0
      %440 = vmatpush1.msra.mxu0 0.0
      %441 = vmatprep.subr.mxu0 0.0
      %442 = vmatpush1.msra.mxu0 0.0
      %443 = vmatprep.subr.mxu0 0.0
      %444 = vmatpush1.msra.mxu0 0.0
      %445 = vmatprep.subr.mxu0 0.0
      %446 = vmatpush1.msra.mxu0 0.0
      %447 = vmatprep.subr.mxu0 0.0
      %448 = vmatpush1.msra.mxu0 0.0
      %449 = vmatprep.subr.mxu0 0.0
      %450 = vmatpush1.msra.mxu0 0.0
      %451 = vmatprep.mubr.f32.mxu0 0.0
      %452 = vmatmul.mubr.f32.gmra.mrb[0].mxu0 %v382
      %v453 = vpop.f32.mrb[0].mxu0
      %v454 = vadd.f32 0.0, %v453
      %v455 = vpop.f32.mrb[0].mxu0
      %456 = vmatprep.mubr.f32.mxu0 0.0
      %457 = vmatmul.mubr.f32.gmra.mrb[0].mxu0 %v385
      %v458 = vpop.f32.mrb[0].mxu0
      %v459 = vadd.f32 0.0, %v458
      %v460 = vpop.f32.mrb[0].mxu0
      %461 = vdwg.mxu0
      %v462 = vadd.f32 %v367, %v454
      %v463 = vadd.f32 %v372, %v459
      %s464 = scalar_lea.vmem %s191, 48
      %v465 = vld [vmem:[%s464] sm:$0xff]
      %v466 = vld [vmem:[%s464 + $0x8] sm:$0xff]
      %s467 = scalar_lea.vmem %s1, 48
      %v468 = vld [vmem:[%s467] sm:$0xff]
      %v469 = vld [vmem:[%s467 + $0x8] sm:$0xff]
      %v471 = vsel %vm212, %v465, 0
      %v474 = vsel %vm212, %v466, 0
      %476 = vmatprep.subr.mxu0 0.0
      %477 = vmatpush1.msra.mxu0 %v468
      %478 = vmatprep.subr.mxu0 0.0
      %479 = vmatpush1.msra.mxu0 %v469
      %480 = vmatprep.subr.mxu0 0.0
      %481 = vmatpush1.msra.mxu0 0.0
      %482 = vmatprep.subr.mxu0 0.0
      %483 = vmatpush1.msra.mxu0 0.0
      %484 = vmatprep.subr.mxu0 0.0
      %485 = vmatpush1.msra.mxu0 0.0
      %486 = vmatprep.subr.mxu0 0.0
      %487 = vmatpush1.msra.mxu0 0.0
      %488 = vmatprep.subr.mxu0 0.0
      %489 = vmatpush1.msra.mxu0 0.0
      %490 = vmatprep.subr.mxu0 0.0
      %491 = vmatpush1.msra.mxu0 0.0
      %492 = vmatprep.subr.mxu0 0.0
      %493 = vmatpush1.msra.mxu0 0.0
      %494 = vmatprep.subr.mxu0 0.0
      %495 = vmatpush1.msra.mxu0 0.0
      %496 = vmatprep.subr.mxu0 0.0
      %497 = vmatpush1.msra.mxu0 0.0
      %498 = vmatprep.subr.mxu0 0.0
      %499 = vmatpush1.msra.mxu0 0.0
      %500 = vmatprep.subr.mxu0 0.0
      %501 = vmatpush1.msra.mxu0 0.0
      %502 = vmatprep.subr.mxu0 0.0
      %503 = vmatpush1.msra.mxu0 0.0
      %504 = vmatprep.subr.mxu0 0.0
      %505 = vmatpush1.msra.mxu0 0.0
      %506 = vmatprep.subr.mxu0 0.0
      %507 = vmatpush1.msra.mxu0 0.0
      %508 = vmatprep.subr.mxu0 0.0
      %509 = vmatpush1.msra.mxu0 0.0
      %510 = vmatprep.subr.mxu0 0.0
      %511 = vmatpush1.msra.mxu0 0.0
      %512 = vmatprep.subr.mxu0 0.0
      %513 = vmatpush1.msra.mxu0 0.0
      %514 = vmatprep.subr.mxu0 0.0
      %515 = vmatpush1.msra.mxu0 0.0
      %516 = vmatprep.subr.mxu0 0.0
      %517 = vmatpush1.msra.mxu0 0.0
      %518 = vmatprep.subr.mxu0 0.0
      %519 = vmatpush1.msra.mxu0 0.0
      %520 = vmatprep.subr.mxu0 0.0
      %521 = vmatpush1.msra.mxu0 0.0
      %522 = vmatprep.subr.mxu0 0.0
      %523 = vmatpush1.msra.mxu0 0.0
      %524 = vmatprep.subr.mxu0 0.0
      %525 = vmatpush1.msra.mxu0 0.0
      %526 = vmatprep.subr.mxu0 0.0
      %527 = vmatpush1.msra.mxu0 0.0
      %528 = vmatprep.subr.mxu0 0.0
      %529 = vmatpush1.msra.mxu0 0.0
      %530 = vmatprep.subr.mxu0 0.0
      %531 = vmatpush1.msra.mxu0 0.0
      %532 = vmatprep.subr.mxu0 0.0
      %533 = vmatpush1.msra.mxu0 0.0
      %534 = vmatprep.subr.mxu0 0.0
      %535 = vmatpush1.msra.mxu0 0.0
      %536 = vmatprep.subr.mxu0 0.0
      %537 = vmatpush1.msra.mxu0 0.0
      %538 = vmatprep.subr.mxu0 0.0
      %539 = vmatpush1.msra.mxu0 0.0
      %540 = vmatprep.mubr.f32.mxu0 0.0
      %541 = vmatmul.mubr.f32.gmra.mrb[0].mxu0 %v471
      %v542 = vpop.f32.mrb[0].mxu0
      %v543 = vadd.f32 0.0, %v542
      %v544 = vpop.f32.mrb[0].mxu0
      %545 = vmatprep.mubr.f32.mxu0 0.0
      %546 = vmatmul.mubr.f32.gmra.mrb[0].mxu0 %v474
      %v547 = vpop.f32.mrb[0].mxu0
      %v548 = vadd.f32 0.0, %v547
      %v549 = vpop.f32.mrb[0].mxu0
      %550 = vdwg.mxu0
      %v551 = vadd.f32 %v462, %v543
      %v552 = vadd.f32 %v463, %v548
      %v553 = vld [vmem:[%s2] sm:$0x1]
      %v555 = vlaneseq
      %v556 = vshrl.u32 %v555, 7
      %v557 = vsub.s32 0, %v556
      %v558 = vrot.slane %v553, %v557
      %v560 = vadd.f32 %v551, %v558
      %v561 = vadd.f32 %v552, %v558
      %v562 = vld [vmem:[%s196] sm:$0x3]
      %v563 = vadd.f32 %v560, %v561
      %v564 = vrot.slane %v563, 4
      %v565 = vadd.f32 %v563, %v564
      %v566 = vrot.slane %v565, 2
      %v567 = vadd.f32 %v565, %v566
      %v568 = vrot.slane %v567, 1
      %v569 = vadd.f32 %v567, %v568
      %v570 = vmul.f32 %v560, %v560
      %v571 = vmul.f32 %v561, %v561
      %v572 = vadd.f32 %v570, %v571
      %v573 = vrot.slane %v572, 4
      %v574 = vadd.f32 %v572, %v573
      %v575 = vrot.slane %v574, 2
      %v576 = vadd.f32 %v574, %v575
      %v577 = vrot.slane %v576, 1
      %v578 = vadd.f32 %v576, %v577
      %vm579 = vcmask 1040384
      %v580 = vsel %vm579, %v569, %v578
      %v581 = vadd.f32 %v562, %v580
      %582 = vst [vmem:[%s196] sm:$0x3] %v581
      %p583 = scmp.lt.s32.totalorder %s18, 1
      %s584 = scalar_select %p583, %s18, 1
      %s585 = smul.addr %s584, 2
      %s586 = scalar_lea.vmem %s3, %s585
      // Predicated region
      $region37: #{graph_conv_forward.2} parent=31 // pred_check
        %p587 = pneg %p114
      $region38: #{graph_conv_forward.2} parent=31 // pred_check_branch
        %589 = sbr.rel (%p587) target = $region40
      $region39: #{graph_conv_forward.2} parent=31 // pred_region
        _
      $region40: #{graph_conv_forward.2} parent=31 // pred_fallthru
        _
    $region32: #{graph_conv_forward.2} parent=5 // pred_fallthru
      _
    %p590 = scmp.le.s32.totalorder 2, %s9
    // Predicated region
    $region41: #{graph_conv_forward.2} parent=5 // pred_check
      %p591 = pneg %p590
    $region42: #{graph_conv_forward.2} parent=5 // pred_check_branch
      %593 = sbr.rel (%p591) target = $region44
    $region43: #{graph_conv_forward.2} parent=5 // pred_region
      %s594 = ssub.s32 %s9, 2
      // Predicated region
      $region45: #{graph_conv_forward.2} parent=43 // pred_check
        %p595 = pneg %p120
      $region46: #{graph_conv_forward.2} parent=43 // pred_check_branch
        %597 = sbr.rel (%p595) target = $region48
      $region47: #{graph_conv_forward.2} parent=43 // pred_region
        %p598 = scmp.lt.s32.totalorder %s20, 1
        %s599 = scalar_select %p598, %s20, 1
        %s600 = smul.addr %s599, 2
        %s601 = scalar_lea.vmem %s3, %s600
      $region48: #{graph_conv_forward.2} parent=43 // pred_fallthru
        _
    $region44: #{graph_conv_forward.2} parent=5 // pred_fallthru
      _
  $region6: #{graph_conv_forward.2} parent=0 // loop_footer
    %s13 = sadd.s32 1, %s9
  $region7: #{graph_conv_forward.2} parent=0 // loop_footer_branch
    %8 = sbr.rel target = $region3
  $region8: #{graph_conv_forward.2} parent=0 // loop_exit
    _

// kernel: graph_conv_forward.3
$region0: #{graph_conv_forward.3}
  #allocation0 [shape = 'u32[]', space=smem, size = 0x4, offset = 0x4, fixed_abs, tag = 'smem constant byte address 0x4 - core index']
  #allocation1 [shape = 'u32[144,128]{1,0:T(1,128)}', space=vmem, size = 0x12000, scoped, tag = 'internal scratch']
  %s0 = inlined_call_operand.vmem [shape: f32[2,4,16,16], index: 0, kind: input, shape index: {}]
  %s1 = inlined_call_operand.vmem [shape: f32[4,16,128], index: 1, kind: input, shape index: {}]
  %s2 = inlined_call_operand.vmem [shape: f32[1,128], index: 2, kind: input, shape index: {}]
  %s3 = inlined_call_operand.vmem [shape: f32[2,16,128], index: 3, kind: output, shape index: {}]
  %s4 = sld [smem:[#allocation0]]
  $region45: #{graph_conv_forward.3} parent=0
    _
  %s6 = ssub.s32 1, %s4
  %s7 = scalar_select 0, %s6, %s4
  loop: start=0, step=1, limit=4
  $region2: #{graph_conv_forward.3} parent=0 // loop_pre_header
    _
  $region3: #{graph_conv_forward.3} parent=0 // loop_header
    %s9 = sphi 0, %s13
    %p10 = scmp.ge.s32.totalorder %s9, 4
    %s16 = sphi 0, %s28
    %s17 = sphi 0, %s24
    %s18 = sphi 0, %s16
    %s19 = sphi 0, %s17
    %s20 = sphi 0, %s18
    %s21 = sphi 0, %s19
    %s33 = sphi 0, %s35
    %s36 = sphi 0, %s33
    %s37 = sphi 0, %s36
    %s53 = sphi 0, %s37
    %s57 = sphi 0, %s57
    %s59 = sphi 0, %s57
    %s60 = sphi 0, %s59
    %s74 = sphi 0, %s60
    %s78 = sphi 0, %s78
    %s80 = sphi 0, %s78
    %s81 = sphi 0, %s80
    %s95 = sphi 0, %s81
    %s103 = sphi 0, %s105
    %s106 = sphi 0, %s103
    %s107 = sphi 0, %s106
    %s123 = sphi 0, %s107
  $region4: #{graph_conv_forward.3} parent=0 // loop_header_branch
    %12 = sbr.rel (%p10) target = $region8
  $region5: #{graph_conv_forward.3} parent=0 // loop_body
    %s14 = ssub.s32 %s9, 1
    %s15 = ssub.s32 %s9, 2
    %s22 = sadd.s32 1, %s17
    %p23 = scmp.ge.s32.totalorder %s22, 1
    %s24 = scalar_select %p23, 0, %s22
    %s25 = sadd.s32 1, %s16
    %s26 = scalar_select %p23, %s25, %s16
    %p27 = scmp.ge.s32.totalorder %s26, 2
    %s28 = scalar_select %p27, 0, %s26
    %s29 = ssub.s32 %s16, %s28
    %s30 = ssub.s32 %s17, %s24
    %s31 = sor.u32 %s29, %s30
    %p32 = scmp.eq.s32.totalorder %s31, 0
    %s34 = sadd.s32 %s33, 1
    %s35 = scalar_select %p32, %s33, %s34
    %p38 = pneg %p32
    %p39 = scmp.eq.s32.totalorder %s9, 1
    %p40 = por %p38, %p39
    %p41 = scmp.ne.s32.totalorder %s33, %s36
    %p42 = scmp.eq.s32.totalorder %s9, 0
    %p43 = por %p41, %p42
    %p44 = scmp.ne.s32.totalorder %s33, %s36
    %p45 = scmp.eq.s32.totalorder %s14, 1
    %p46 = por %p44, %p45
    %p47 = scmp.ne.s32.totalorder %s36, %s37
    %p48 = scmp.eq.s32.totalorder %s14, 0
    %p49 = por %p47, %p48
    %p50 = scmp.ne.s32.totalorder %s36, %s37
    %p51 = scmp.eq.s32.totalorder %s15, 1
    %p52 = por %p50, %p51
    %p54 = scmp.ne.s32.totalorder %s37, %s53
    %p55 = scmp.eq.s32.totalorder %s15, 0
    %p56 = por %p54, %p55
    %s58 = sadd.s32 %s57, 1
    %p61 = scmp.eq.s32.totalorder %s9, 1
    %p62 = scmp.ne.s32.totalorder %s57, %s59
    %p63 = scmp.eq.s32.totalorder %s9, 0
    %p64 = por %p62, %p63
    %p65 = scmp.ne.s32.totalorder %s57, %s59
    %p66 = scmp.eq.s32.totalorder %s14, 1
    %p67 = por %p65, %p66
    %p68 = scmp.ne.s32.totalorder %s59, %s60
    %p69 = scmp.eq.s32.totalorder %s14, 0
    %p70 = por %p68, %p69
    %p71 = scmp.ne.s32.totalorder %s59, %s60
    %p72 = scmp.eq.s32.totalorder %s15, 1
    %p73 = por %p71, %p72
    %p75 = scmp.ne.s32.totalorder %s60, %s74
    %p76 = scmp.eq.s32.totalorder %s15, 0
    %p77 = por %p75, %p76
    %s79 = sadd.s32 %s78, 1
    %p82 = scmp.eq.s32.totalorder %s9, 1
    %p83 = scmp.ne.s32.totalorder %s78, %s80
    %p84 = scmp.eq.s32.totalorder %s9, 0
    %p85 = por %p83, %p84
    %p86 = scmp.ne.s32.totalorder %s78, %s80
    %p87 = scmp.eq.s32.totalorder %s14, 1
    %p88 = por %p86, %p87
    %p89 = scmp.ne.s32.totalorder %s80, %s81
    %p90 = scmp.eq.s32.totalorder %s14, 0
    %p91 = por %p89, %p90
    %p92 = scmp.ne.s32.totalorder %s80, %s81
    %p93 = scmp.eq.s32.totalorder %s15, 1
    %p94 = por %p92, %p93
    %p96 = scmp.ne.s32.totalorder %s81, %s95
    %p97 = scmp.eq.s32.totalorder %s15, 0
    %p98 = por %p96, %p97
    %s99 = ssub.s32 %s16, %s28
    %s100 = ssub.s32 %s17, %s24
    %s101 = sor.u32 %s99, %s100
    %p102 = scmp.eq.s32.totalorder %s101, 0
    %s104 = sadd.s32 %s103, 1
    %s105 = scalar_select %p102, %s103, %s104
    %p108 = pneg %p102
    %p109 = scmp.eq.s32.totalorder %s9, 1
    %p110 = por %p108, %p109
    %p111 = scmp.ne.s32.totalorder %s103, %s106
    %p112 = scmp.eq.s32.totalorder %s9, 0
    %p113 = por %p111, %p112
    %p114 = scmp.ne.s32.totalorder %s103, %s106
    %p115 = scmp.eq.s32.totalorder %s14, 1
    %p116 = por %p114, %p115
    %p117 = scmp.ne.s32.totalorder %s106, %s107
    %p118 = scmp.eq.s32.totalorder %s14, 0
    %p119 = por %p117, %p118
    %p120 = scmp.ne.s32.totalorder %s106, %s107
    %p121 = scmp.eq.s32.totalorder %s15, 1
    %p122 = por %p120, %p121
    %p124 = scmp.ne.s32.totalorder %s107, %s123
    %p125 = scmp.eq.s32.totalorder %s15, 0
    %p126 = por %p124, %p125
    %p127 = scmp.le.s32.totalorder 1, %s9
    %p128 = scmp.lt.s32.totalorder %s9, 3
    %p129 = pnand %p127, %p128
    %p130 = pneg %p129
    // Predicated region
    $region9: #{graph_conv_forward.3} parent=5 // pred_check
      _
    $region10: #{graph_conv_forward.3} parent=5 // pred_check_branch
      %132 = sbr.rel (%p129) target = $region12
    $region11: #{graph_conv_forward.3} parent=5 // pred_region
      %s133 = ssub.s32 %s9, 1
      // Predicated region
      $region13: #{graph_conv_forward.3} parent=11 // pred_check
        %p134 = pneg %p70
      $region14: #{graph_conv_forward.3} parent=11 // pred_check_branch
        %136 = sbr.rel (%p134) target = $region16
      $region15: #{graph_conv_forward.3} parent=11 // pred_region
        _
      $region16: #{graph_conv_forward.3} parent=11 // pred_fallthru
        _
      // Predicated region
      $region17: #{graph_conv_forward.3} parent=11 // pred_check
        %p137 = pneg %p91
      $region18: #{graph_conv_forward.3} parent=11 // pred_check_branch
        %139 = sbr.rel (%p137) target = $region20
      $region19: #{graph_conv_forward.3} parent=11 // pred_region
        _
      $region20: #{graph_conv_forward.3} parent=11 // pred_fallthru
        _
    $region12: #{graph_conv_forward.3} parent=5 // pred_fallthru
      _
    %p140 = scmp.lt.s32.totalorder %s9, 2
    // Predicated region
    $region21: #{graph_conv_forward.3} parent=5 // pred_check
      %p141 = pneg %p140
    $region22: #{graph_conv_forward.3} parent=5 // pred_check_branch
      %143 = sbr.rel (%p141) target = $region24
    $region23: #{graph_conv_forward.3} parent=5 // pred_region
      // Predicated region
      $region25: #{graph_conv_forward.3} parent=23 // pred_check
        %p144 = pneg %p43
      $region26: #{graph_conv_forward.3} parent=23 // pred_check_branch
        %146 = sbr.rel (%p144) target = $region28
      $region27: #{graph_conv_forward.3} parent=23 // pred_region
        %s147 = smul.u32 2, %s17
        %p148 = scmp.lt.s32.totalorder %s16, 1
        %s149 = scalar_select %p148, %s16, 1
        %p150 = scmp.lt.s32.totalorder %s147, 1
        %s151 = scalar_select %p150, %s147, 1
        %s152 = smul.addr %s149, 8
        %s153 = sadd.s32 %s151, %s152
        %s154 = smul.addr %s153, 8
        %s155 = scalar_lea.vmem %s0, %s154
        %s156 = smul.u32 2, %s17
      $region28: #{graph_conv_forward.3} parent=23 // pred_fallthru
        _
    $region24: #{graph_conv_forward.3} parent=5 // pred_fallthru
      _
    %p157 = scmp.le.s32.totalorder 1, %s9
    %p158 = scmp.lt.s32.totalorder %s9, 3
    %p159 = pnand %p157, %p158
    %p160 = pneg %p159
    // Predicated region
    $region29: #{graph_conv_forward.3} parent=5 // pred_check
      _
    $region30: #{graph_conv_forward.3} parent=5 // pred_check_branch
      %162 = sbr.rel (%p159) target = $region32
    $region31: #{graph_conv_forward.3} parent=5 // pred_region
      %s163 = ssub.s32 %s9, 1
      %s164 = smul.u32 2, %s19
      %p165 = scmp.lt.s32.totalorder %s18, 1
      %s166 = scalar_select %p165, %s18, 1
      %p167 = scmp.lt.s32.totalorder %s164, 1
      %s168 = scalar_select %p167, %s164, 1
      %s169 = smul.addr %s166, 8
      %s170 = sadd.s32 %s168, %s169
      %s171 = smul.addr %s170, 8
      %s172 = scalar_lea.vmem %s0, %s171
      %p173 = pneg %p49
      %p174 = pneg %p46
      %p175 = pneg %p70
      %p176 = pneg %p67
      %p177 = pneg %p91
      %p178 = pneg %p88
      %p179 = pneg %p119
      %p180 = pneg %p116
      %s181 = smul.u32 2, %s19
      %p182 = scmp.lt.s32.totalorder %s18, 1
      %s183 = scalar_select %p182, %s18, 1
      %p184 = scmp.lt.s32.totalorder %s181, 1
      %s185 = scalar_select %p184, %s181, 1
      %s186 = smul.addr %s183, 2
      %s187 = sadd.s32 %s185, %s186
      %s188 = smul.addr %s187, 8
      %s189 = scalar_lea.vmem %s3, %s188
      %s190 = smul.u32 2, %s19
      %p191 = scmp.lt.s32.totalorder %s18, 1
      %s192 = scalar_select %p191, %s18, 1
      %p193 = scmp.lt.s32.totalorder %s190, 1
      %s194 = scalar_select %p193, %s190, 1
      %s195 = smul.addr %s192, 8
      %s196 = sadd.s32 %s194, %s195
      %s197 = smul.addr %s196, 8
      %s198 = scalar_lea.vmem %s0, %s197
      %s199 = smul.u32 2, %s19
      %s200 = smul.u32 2, %s19
      %p201 = scmp.lt.s32.totalorder %s18, 1
      %s202 = scalar_select %p201, %s18, 1
      %p203 = scmp.lt.s32.totalorder %s200, 1
      %s204 = scalar_select %p203, %s200, 1
      %s205 = smul.addr %s202, 2
      %s206 = sadd.s32 %s204, %s205
      %s207 = smul.addr %s206, 8
      %s208 = scalar_lea.vmem %s3, %s207
      %s209 = smul.u32 2, %s19
      %v210 = vld [vmem:[%s198] sm:$0xff]
      %v211 = vld [vmem:[%s198 + $0x8] sm:$0xff]
      %v212 = vld [vmem:[%s1] sm:$0xff]
      %v213 = vld [vmem:[%s1 + $0x8] sm:$0xff]
      %s214 = scalar_lea.vmem %s198, 16
      %v215 = vld [vmem:[%s214] sm:$0xff]
      %v216 = vld [vmem:[%s214 + $0x8] sm:$0xff]
      %s217 = scalar_lea.vmem %s1, 16
      %v218 = vld [vmem:[%s217] sm:$0xff]
      %v219 = vld [vmem:[%s217 + $0x8] sm:$0xff]
      %vm220 = vcmask 130048
      %v222 = vsel %vm220, %v215, 0
      %v225 = vsel %vm220, %v216, 0
      %227 = vmatprep.subr.mxu0 0.0
      %228 = vmatpush1.msra.mxu0 %v218
      %229 = vmatprep.subr.mxu0 0.0
      %230 = vmatpush1.msra.mxu0 %v219
      %231 = vmatprep.subr.mxu0 0.0
      %232 = vmatpush1.msra.mxu0 0.0
      %233 = vmatprep.subr.mxu0 0.0
      %234 = vmatpush1.msra.mxu0 0.0
      %235 = vmatprep.subr.mxu0 0.0
      %236 = vmatpush1.msra.mxu0 0.0
      %237 = vmatprep.subr.mxu0 0.0
      %238 = vmatpush1.msra.mxu0 0.0
      %239 = vmatprep.subr.mxu0 0.0
      %240 = vmatpush1.msra.mxu0 0.0
      %241 = vmatprep.subr.mxu0 0.0
      %242 = vmatpush1.msra.mxu0 0.0
      %243 = vmatprep.subr.mxu0 0.0
      %244 = vmatpush1.msra.mxu0 0.0
      %245 = vmatprep.subr.mxu0 0.0
      %246 = vmatpush1.msra.mxu0 0.0
      %247 = vmatprep.subr.mxu0 0.0
      %248 = vmatpush1.msra.mxu0 0.0
      %249 = vmatprep.subr.mxu0 0.0
      %250 = vmatpush1.msra.mxu0 0.0
      %251 = vmatprep.subr.mxu0 0.0
      %252 = vmatpush1.msra.mxu0 0.0
      %253 = vmatprep.subr.mxu0 0.0
      %254 = vmatpush1.msra.mxu0 0.0
      %255 = vmatprep.subr.mxu0 0.0
      %256 = vmatpush1.msra.mxu0 0.0
      %257 = vmatprep.subr.mxu0 0.0
      %258 = vmatpush1.msra.mxu0 0.0
      %259 = vmatprep.subr.mxu0 0.0
      %260 = vmatpush1.msra.mxu0 0.0
      %261 = vmatprep.subr.mxu0 0.0
      %262 = vmatpush1.msra.mxu0 0.0
      %263 = vmatprep.subr.mxu0 0.0
      %264 = vmatpush1.msra.mxu0 0.0
      %265 = vmatprep.subr.mxu0 0.0
      %266 = vmatpush1.msra.mxu0 0.0
      %267 = vmatprep.subr.mxu0 0.0
      %268 = vmatpush1.msra.mxu0 0.0
      %269 = vmatprep.subr.mxu0 0.0
      %270 = vmatpush1.msra.mxu0 0.0
      %271 = vmatprep.subr.mxu0 0.0
      %272 = vmatpush1.msra.mxu0 0.0
      %273 = vmatprep.subr.mxu0 0.0
      %274 = vmatpush1.msra.mxu0 0.0
      %275 = vmatprep.subr.mxu0 0.0
      %276 = vmatpush1.msra.mxu0 0.0
      %277 = vmatprep.subr.mxu0 0.0
      %278 = vmatpush1.msra.mxu0 0.0
      %279 = vmatprep.subr.mxu0 0.0
      %280 = vmatpush1.msra.mxu0 0.0
      %281 = vmatprep.subr.mxu0 0.0
      %282 = vmatpush1.msra.mxu0 0.0
      %283 = vmatprep.subr.mxu0 0.0
      %284 = vmatpush1.msra.mxu0 0.0
      %285 = vmatprep.subr.mxu0 0.0
      %286 = vmatpush1.msra.mxu0 0.0
      %287 = vmatprep.subr.mxu0 0.0
      %288 = vmatpush1.msra.mxu0 0.0
      %289 = vmatprep.subr.mxu0 0.0
      %290 = vmatpush1.msra.mxu0 0.0
      %291 = vmatprep.mubr.f32.mxu0 0.0
      %292 = vmatmul.mubr.f32.gmra.mrb[0].mxu0 %v222
      %v293 = vpop.f32.mrb[0].mxu0
      %v294 = vadd.f32 0.0, %v293
      %v295 = vpop.f32.mrb[0].mxu0
      %296 = vmatprep.mubr.f32.mxu0 0.0
      %297 = vmatmul.mubr.f32.gmra.mrb[0].mxu0 %v225
      %v298 = vpop.f32.mrb[0].mxu0
      %v299 = vadd.f32 0.0, %v298
      %v300 = vpop.f32.mrb[0].mxu0
      %301 = vdwg.mxu0
      %v303 = vsel %vm220, %v210, 0
      %v306 = vsel %vm220, %v211, 0
      %308 = vmatprep.subr.mxu0 0.0
      %309 = vmatpush1.msra.mxu0 %v212
      %310 = vmatprep.subr.mxu0 0.0
      %311 = vmatpush1.msra.mxu0 %v213
      %312 = vmatprep.subr.mxu0 0.0
      %313 = vmatpush1.msra.mxu0 0.0
      %314 = vmatprep.subr.mxu0 0.0
      %315 = vmatpush1.msra.mxu0 0.0
      %316 = vmatprep.subr.mxu0 0.0
      %317 = vmatpush1.msra.mxu0 0.0
      %318 = vmatprep.subr.mxu0 0.0
      %319 = vmatpush1.msra.mxu0 0.0
      %320 = vmatprep.subr.mxu0 0.0
      %321 = vmatpush1.msra.mxu0 0.0
      %322 = vmatprep.subr.mxu0 0.0
      %323 = vmatpush1.msra.mxu0 0.0
      %324 = vmatprep.subr.mxu0 0.0
      %325 = vmatpush1.msra.mxu0 0.0
      %326 = vmatprep.subr.mxu0 0.0
      %327 = vmatpush1.msra.mxu0 0.0
      %328 = vmatprep.subr.mxu0 0.0
      %329 = vmatpush1.msra.mxu0 0.0
      %330 = vmatprep.subr.mxu0 0.0
      %331 = vmatpush1.msra.mxu0 0.0
      %332 = vmatprep.subr.mxu0 0.0
      %333 = vmatpush1.msra.mxu0 0.0
      %334 = vmatprep.subr.mxu0 0.0
      %335 = vmatpush1.msra.mxu0 0.0
      %336 = vmatprep.subr.mxu0 0.0
      %337 = vmatpush1.msra.mxu0 0.0
      %338 = vmatprep.subr.mxu0 0.0
      %339 = vmatpush1.msra.mxu0 0.0
      %340 = vmatprep.subr.mxu0 0.0
      %341 = vmatpush1.msra.mxu0 0.0
      %342 = vmatprep.subr.mxu0 0.0
      %343 = vmatpush1.msra.mxu0 0.0
      %344 = vmatprep.subr.mxu0 0.0
      %345 = vmatpush1.msra.mxu0 0.0
      %346 = vmatprep.subr.mxu0 0.0
      %347 = vmatpush1.msra.mxu0 0.0
      %348 = vmatprep.subr.mxu0 0.0
      %349 = vmatpush1.msra.mxu0 0.0
      %350 = vmatprep.subr.mxu0 0.0
      %351 = vmatpush1.msra.mxu0 0.0
      %352 = vmatprep.subr.mxu0 0.0
      %353 = vmatpush1.msra.mxu0 0.0
      %354 = vmatprep.subr.mxu0 0.0
      %355 = vmatpush1.msra.mxu0 0.0
      %356 = vmatprep.subr.mxu0 0.0
      %357 = vmatpush1.msra.mxu0 0.0
      %358 = vmatprep.subr.mxu0 0.0
      %359 = vmatpush1.msra.mxu0 0.0
      %360 = vmatprep.subr.mxu0 0.0
      %361 = vmatpush1.msra.mxu0 0.0
      %362 = vmatprep.subr.mxu0 0.0
      %363 = vmatpush1.msra.mxu0 0.0
      %364 = vmatprep.subr.mxu0 0.0
      %365 = vmatpush1.msra.mxu0 0.0
      %366 = vmatprep.subr.mxu0 0.0
      %367 = vmatpush1.msra.mxu0 0.0
      %368 = vmatprep.subr.mxu0 0.0
      %369 = vmatpush1.msra.mxu0 0.0
      %370 = vmatprep.subr.mxu0 0.0
      %371 = vmatpush1.msra.mxu0 0.0
      %372 = vmatprep.mubr.f32.mxu0 0.0
      %373 = vmatmul.mubr.f32.gmra.mrb[0].mxu0 %v303
      %v374 = vpop.f32.mrb[0].mxu0
      %v375 = vadd.f32 %v294, %v374
      %v376 = vpop.f32.mrb[0].mxu0
      %377 = vmatprep.mubr.f32.mxu0 0.0
      %378 = vmatmul.mubr.f32.gmra.mrb[0].mxu0 %v306
      %v379 = vpop.f32.mrb[0].mxu0
      %v380 = vadd.f32 %v299, %v379
      %v381 = vpop.f32.mrb[0].mxu0
      %382 = vdwg.mxu0
      %s383 = scalar_lea.vmem %s198, 32
      %v384 = vld [vmem:[%s383] sm:$0xff]
      %v385 = vld [vmem:[%s383 + $0x8] sm:$0xff]
      %s386 = scalar_lea.vmem %s1, 32
      %v387 = vld [vmem:[%s386] sm:$0xff]
      %v388 = vld [vmem:[%s386 + $0x8] sm:$0xff]
      %v390 = vsel %vm220, %v384, 0
      %v393 = vsel %vm220, %v385, 0
      %395 = vmatprep.subr.mxu0 0.0
      %396 = vmatpush1.msra.mxu0 %v387
      %397 = vmatprep.subr.mxu0 0.0
      %398 = vmatpush1.msra.mxu0 %v388
      %399 = vmatprep.subr.mxu0 0.0
      %400 = vmatpush1.msra.mxu0 0.0
      %401 = vmatprep.subr.mxu0 0.0
      %402 = vmatpush1.msra.mxu0 0.0
      %403 = vmatprep.subr.mxu0 0.0
      %404 = vmatpush1.msra.mxu0 0.0
      %405 = vmatprep.subr.mxu0 0.0
      %406 = vmatpush1.msra.mxu0 0.0
      %407 = vmatprep.subr.mxu0 0.0
      %408 = vmatpush1.msra.mxu0 0.0
      %409 = vmatprep.subr.mxu0 0.0
      %410 = vmatpush1.msra.mxu0 0.0
      %411 = vmatprep.subr.mxu0 0.0
      %412 = vmatpush1.msra.mxu0 0.0
      %413 = vmatprep.subr.mxu0 0.0
      %414 = vmatpush1.msra.mxu0 0.0
      %415 = vmatprep.subr.mxu0 0.0
      %416 = vmatpush1.msra.mxu0 0.0
      %417 = vmatprep.subr.mxu0 0.0
      %418 = vmatpush1.msra.mxu0 0.0
      %419 = vmatprep.subr.mxu0 0.0
      %420 = vmatpush1.msra.mxu0 0.0
      %421 = vmatprep.subr.mxu0 0.0
      %422 = vmatpush1.msra.mxu0 0.0
      %423 = vmatprep.subr.mxu0 0.0
      %424 = vmatpush1.msra.mxu0 0.0
      %425 = vmatprep.subr.mxu0 0.0
      %426 = vmatpush1.msra.mxu0 0.0
      %427 = vmatprep.subr.mxu0 0.0
      %428 = vmatpush1.msra.mxu0 0.0
      %429 = vmatprep.subr.mxu0 0.0
      %430 = vmatpush1.msra.mxu0 0.0
      %431 = vmatprep.subr.mxu0 0.0
      %432 = vmatpush1.msra.mxu0 0.0
      %433 = vmatprep.subr.mxu0 0.0
      %434 = vmatpush1.msra.mxu0 0.0
      %435 = vmatprep.subr.mxu0 0.0
      %436 = vmatpush1.msra.mxu0 0.0
      %437 = vmatprep.subr.mxu0 0.0
      %438 = vmatpush1.msra.mxu0 0.0
      %439 = vmatprep.subr.mxu0 0.0
      %440 = vmatpush1.msra.mxu0 0.0
      %441 = vmatprep.subr.mxu0 0.0
      %442 = vmatpush1.msra.mxu0 0.0
      %443 = vmatprep.subr.mxu0 0.0
      %444 = vmatpush1.msra.mxu0 0.0
      %445 = vmatprep.subr.mxu0 0.0
      %446 = vmatpush1.msra.mxu0 0.0
      %447 = vmatprep.subr.mxu0 0.0
      %448 = vmatpush1.msra.mxu0 0.0
      %449 = vmatprep.subr.mxu0 0.0
      %450 = vmatpush1.msra.mxu0 0.0
      %451 = vmatprep.subr.mxu0 0.0
      %452 = vmatpush1.msra.mxu0 0.0
      %453 = vmatprep.subr.mxu0 0.0
      %454 = vmatpush1.msra.mxu0 0.0
      %455 = vmatprep.subr.mxu0 0.0
      %456 = vmatpush1.msra.mxu0 0.0
      %457 = vmatprep.subr.mxu0 0.0
      %458 = vmatpush1.msra.mxu0 0.0
      %459 = vmatprep.mubr.f32.mxu0 0.0
      %460 = vmatmul.mubr.f32.gmra.mrb[0].mxu0 %v390
      %v461 = vpop.f32.mrb[0].mxu0
      %v462 = vadd.f32 0.0, %v461
      %v463 = vpop.f32.mrb[0].mxu0
      %464 = vmatprep.mubr.f32.mxu0 0.0
      %465 = vmatmul.mubr.f32.gmra.mrb[0].mxu0 %v393
      %v466 = vpop.f32.mrb[0].mxu0
      %v467 = vadd.f32 0.0, %v466
      %v468 = vpop.f32.mrb[0].mxu0
      %469 = vdwg.mxu0
      %v470 = vadd.f32 %v375, %v462
      %v471 = vadd.f32 %v380, %v467
      %s472 = scalar_lea.vmem %s198, 48
      %v473 = vld [vmem:[%s472] sm:$0xff]
      %v474 = vld [vmem:[%s472 + $0x8] sm:$0xff]
      %s475 = scalar_lea.vmem %s1, 48
      %v476 = vld [vmem:[%s475] sm:$0xff]
      %v477 = vld [vmem:[%s475 + $0x8] sm:$0xff]
      %v479 = vsel %vm220, %v473, 0
      %v482 = vsel %vm220, %v474, 0
      %484 = vmatprep.subr.mxu0 0.0
      %485 = vmatpush1.msra.mxu0 %v476
      %486 = vmatprep.subr.mxu0 0.0
      %487 = vmatpush1.msra.mxu0 %v477
      %488 = vmatprep.subr.mxu0 0.0
      %489 = vmatpush1.msra.mxu0 0.0
      %490 = vmatprep.subr.mxu0 0.0
      %491 = vmatpush1.msra.mxu0 0.0
      %492 = vmatprep.subr.mxu0 0.0
      %493 = vmatpush1.msra.mxu0 0.0
      %494 = vmatprep.subr.mxu0 0.0
      %495 = vmatpush1.msra.mxu0 0.0
      %496 = vmatprep.subr.mxu0 0.0
      %497 = vmatpush1.msra.mxu0 0.0
      %498 = vmatprep.subr.mxu0 0.0
      %499 = vmatpush1.msra.mxu0 0.0
      %500 = vmatprep.subr.mxu0 0.0
      %501 = vmatpush1.msra.mxu0 0.0
      %502 = vmatprep.subr.mxu0 0.0
      %503 = vmatpush1.msra.mxu0 0.0
      %504 = vmatprep.subr.mxu0 0.0
      %505 = vmatpush1.msra.mxu0 0.0
      %506 = vmatprep.subr.mxu0 0.0
      %507 = vmatpush1.msra.mxu0 0.0
      %508 = vmatprep.subr.mxu0 0.0
      %509 = vmatpush1.msra.mxu0 0.0
      %510 = vmatprep.subr.mxu0 0.0
      %511 = vmatpush1.msra.mxu0 0.0
      %512 = vmatprep.subr.mxu0 0.0
      %513 = vmatpush1.msra.mxu0 0.0
      %514 = vmatprep.subr.mxu0 0.0
      %515 = vmatpush1.msra.mxu0 0.0
      %516 = vmatprep.subr.mxu0 0.0
      %517 = vmatpush1.msra.mxu0 0.0
      %518 = vmatprep.subr.mxu0 0.0
      %519 = vmatpush1.msra.mxu0 0.0
      %520 = vmatprep.subr.mxu0 0.0
      %521 = vmatpush1.msra.mxu0 0.0
      %522 = vmatprep.subr.mxu0 0.0
      %523 = vmatpush1.msra.mxu0 0.0
      %524 = vmatprep.subr.mxu0 0.0
      %525 = vmatpush1.msra.mxu0 0.0
      %526 = vmatprep.subr.mxu0 0.0
      %527 = vmatpush1.msra.mxu0 0.0
      %528 = vmatprep.subr.mxu0 0.0
      %529 = vmatpush1.msra.mxu0 0.0
      %530 = vmatprep.subr.mxu0 0.0
      %531 = vmatpush1.msra.mxu0 0.0
      %532 = vmatprep.subr.mxu0 0.0
      %533 = vmatpush1.msra.mxu0 0.0
      %534 = vmatprep.subr.mxu0 0.0
      %535 = vmatpush1.msra.mxu0 0.0
      %536 = vmatprep.subr.mxu0 0.0
      %537 = vmatpush1.msra.mxu0 0.0
      %538 = vmatprep.subr.mxu0 0.0
      %539 = vmatpush1.msra.mxu0 0.0
      %540 = vmatprep.subr.mxu0 0.0
      %541 = vmatpush1.msra.mxu0 0.0
      %542 = vmatprep.subr.mxu0 0.0
      %543 = vmatpush1.msra.mxu0 0.0
      %544 = vmatprep.subr.mxu0 0.0
      %545 = vmatpush1.msra.mxu0 0.0
      %546 = vmatprep.subr.mxu0 0.0
      %547 = vmatpush1.msra.mxu0 0.0
      %548 = vmatprep.mubr.f32.mxu0 0.0
      %549 = vmatmul.mubr.f32.gmra.mrb[0].mxu0 %v479
      %v550 = vpop.f32.mrb[0].mxu0
      %v551 = vadd.f32 0.0, %v550
      %v552 = vpop.f32.mrb[0].mxu0
      %553 = vmatprep.mubr.f32.mxu0 0.0
      %554 = vmatmul.mubr.f32.gmra.mrb[0].mxu0 %v482
      %v555 = vpop.f32.mrb[0].mxu0
      %v556 = vadd.f32 0.0, %v555
      %v557 = vpop.f32.mrb[0].mxu0
      %558 = vdwg.mxu0
      %v559 = vadd.f32 %v470, %v551
      %v560 = vadd.f32 %v471, %v556
      %v561 = vld [vmem:[%s2] sm:$0x1]
      %v563 = vlaneseq
      %v564 = vshrl.u32 %v563, 7
      %v565 = vsub.s32 0, %v564
      %v566 = vrot.slane %v561, %v565
      %v568 = vadd.f32 %v559, %v566
      %v569 = vadd.f32 %v560, %v566
      %v570 = vmax.f32 %v568, 0.0
      %v571 = vmax.f32 %v569, 0.0
      %572 = vst [vmem:[%s208] sm:$0xff] %v570
      %573 = vst [vmem:[%s208 + $0x8] sm:$0xff] %v571
      %s574 = smul.u32 2, %s19
      %p575 = scmp.lt.s32.totalorder %s18, 1
      %s576 = scalar_select %p575, %s18, 1
      %p577 = scmp.lt.s32.totalorder %s574, 1
      %s578 = scalar_select %p577, %s574, 1
      %s579 = smul.addr %s576, 2
      %s580 = sadd.s32 %s578, %s579
      %s581 = smul.addr %s580, 8
      %s582 = scalar_lea.vmem %s3, %s581
      // Predicated region
      $region33: #{graph_conv_forward.3} parent=31 // pred_check
        %p583 = pneg %p116
      $region34: #{graph_conv_forward.3} parent=31 // pred_check_branch
        %585 = sbr.rel (%p583) target = $region36
      $region35: #{graph_conv_forward.3} parent=31 // pred_region
        %s586 = smul.u32 2, %s19
      $region36: #{graph_conv_forward.3} parent=31 // pred_fallthru
        _
    $region32: #{graph_conv_forward.3} parent=5 // pred_fallthru
      _
    %p587 = scmp.le.s32.totalorder 2, %s9
    // Predicated region
    $region37: #{graph_conv_forward.3} parent=5 // pred_check
      %p588 = pneg %p587
    $region38: #{graph_conv_forward.3} parent=5 // pred_check_branch
      %590 = sbr.rel (%p588) target = $region40
    $region39: #{graph_conv_forward.3} parent=5 // pred_region
      %s591 = ssub.s32 %s9, 2
      // Predicated region
      $region41: #{graph_conv_forward.3} parent=39 // pred_check
        %p592 = pneg %p122
      $region42: #{graph_conv_forward.3} parent=39 // pred_check_branch
        %594 = sbr.rel (%p592) target = $region44
      $region43: #{graph_conv_forward.3} parent=39 // pred_region
        %s595 = smul.u32 2, %s21
        %p596 = scmp.lt.s32.totalorder %s20, 1
        %s597 = scalar_select %p596, %s20, 1
        %p598 = scmp.lt.s32.totalorder %s595, 1
        %s599 = scalar_select %p598, %s595, 1
        %s600 = smul.addr %s597, 2
        %s601 = sadd.s32 %s599, %s600
        %s602 = smul.addr %s601, 8
        %s603 = scalar_lea.vmem %s3, %s602
      $region44: #{graph_conv_forward.3} parent=39 // pred_fallthru
        _
    $region40: #{graph_conv_forward.3} parent=5 // pred_fallthru
      _
  $region6: #{graph_conv_forward.3} parent=0 // loop_footer
    %s13 = sadd.s32 1, %s9
  $region7: #{graph_conv_forward.3} parent=0 // loop_footer_branch
    %8 = sbr.rel target = $region3
  $region8: #{graph_conv_forward.3} parent=0 // loop_exit
    _

</llo_original>
